<compile_context>
chip_gen: v7x
topology: tpu7x:2x2x1
jax: 0.10.0
libtpu: 0.0.40
codegen_flags: <defaults>
</compile_context>

<pallas_src>
import functools

import jax
import jax.numpy as jnp
from jax.experimental import pallas as pl
from jax.experimental.pallas import tpu as pltpu


def _leaky_relu(x, slope=0.2):
    return jnp.where(x > 0, x, slope * x)


def _round_up(n, m):
    return ((n + m - 1) // m) * m


def _device_info():
    """Static chip facts used to pick tiling / activation dtype."""
    try:
        kind = jax.devices()[0].device_kind.lower()
    except Exception:
        kind = ""
    two_tensorcores = "v7" in kind  # v7x has 2 TensorCores per chip
    # v2-v5 have no bf16 VPU; v6e/v7x do.
    has_bf16_vpu = not any(v in kind for v in ("v2", "v3", "v4", "v5"))
    return two_tensorcores, has_bf16_vpu


def generator_kernel(x_ref,
                     w1_ref, b1_ref,
                     w2_ref, b2_ref,
                     w3_ref, b3_ref,
                     w4_ref, b4_ref,
                     o_ref):
    """Fused 4-layer MLP for one batch tile.

    Matmuls run in the weights' storage dtype (bf16 -> bf16 MXU path) with f32
    accumulation. Bias-add + leaky_relu run in the biases' dtype (bf16 on
    v6e/v7x, f32 on v5e); the final bias-add + tanh stay in f32.
    """
    mm_dtype = w1_ref.dtype
    act_dtype = b1_ref.dtype

    # fc1: cast x to the MXU dtype in-kernel (no wrapper-side cast / HBM pass).
    h = jnp.dot(x_ref[...].astype(mm_dtype), w1_ref[...],
                preferred_element_type=jnp.float32)
    h = _leaky_relu(h.astype(act_dtype) + b1_ref[...])

    h = jnp.dot(h.astype(mm_dtype), w2_ref[...],
                preferred_element_type=jnp.float32)
    h = _leaky_relu(h.astype(act_dtype) + b2_ref[...])

    h = jnp.dot(h.astype(mm_dtype), w3_ref[...],
                preferred_element_type=jnp.float32)
    h = _leaky_relu(h.astype(act_dtype) + b3_ref[...])

    h = jnp.dot(h.astype(mm_dtype), w4_ref[...],
                preferred_element_type=jnp.float32)
    o_ref[...] = jnp.tanh(h + b4_ref[...]).astype(o_ref.dtype)


@functools.partial(
    jax.jit,
    static_argnames=("tile_m", "matmul_dtype", "act_dtype", "two_tc"))
def _generator_forward_impl(x, params, *, tile_m, matmul_dtype, act_dtype, two_tc):
    B, in_dim = x.shape
    out_dtype = x.dtype

    # Weights in the MXU input dtype; biases 1..3 in the activation dtype,
    # final bias in f32. Biases reshaped to (1, dim) 2-D VMEM tiles.
    w1 = params["w1"].astype(matmul_dtype)
    w2 = params["w2"].astype(matmul_dtype)
    w3 = params["w3"].astype(matmul_dtype)
    w4 = params["w4"].astype(matmul_dtype)
    b1 = params["b1"].astype(act_dtype).reshape(1, -1)
    b2 = params["b2"].astype(act_dtype).reshape(1, -1)
    b3 = params["b3"].astype(act_dtype).reshape(1, -1)
    b4 = params["b4"].astype(jnp.float32).reshape(1, -1)
    out_dim = w4.shape[1]

    # --- Lane-dim padding ----------------------------------------------------
    # fc1 contraction dim -> multiple of 128 (fills the MXU K depth);
    # fc4 output dim -> multiple of 128 (lane-dense output, unmasked stores).
    in_dim_pad = _round_up(in_dim, 128)
    out_dim_pad = _round_up(out_dim, 128)
    if in_dim_pad != in_dim:
        w1 = jnp.pad(w1, ((0, in_dim_pad - in_dim), (0, 0)))
    if out_dim_pad != out_dim:
        w4 = jnp.pad(w4, ((0, 0), (0, out_dim_pad - out_dim)))
        b4 = jnp.pad(b4, ((0, 0), (0, out_dim_pad - out_dim)))

    # --- Batch tiling ----------------------------------------------------------
    # Largest sublane-aligned tile up to tile_m rows. Only split a single big
    # tile in two on a 2-TensorCore part (v7x) so the "parallel" axis can be
    # sharded across cores; keep each half >= 256 rows and 8-aligned.
    tile = _round_up(min(tile_m, _round_up(B, 8)), 8)
    if two_tc and pl.cdiv(B, tile) < 2 and tile >= 512:
        tile = _round_up(tile // 2, 8)
    num_tiles = pl.cdiv(B, tile)
    B_pad = num_tiles * tile

    # Fold the ragged-batch zero pad and the K pad of x into one jnp.pad.
    pad_rows = B_pad - B
    pad_cols = in_dim_pad - in_dim
    if pad_rows or pad_cols:
        x = jnp.pad(x, ((0, pad_rows), (0, pad_cols)))

    # Weights/biases are revisited every grid step (constant index_map), so a
    # single VMEM buffer suffices — no double-buffering.
    def const_spec(arr):
        return pl.BlockSpec(arr.shape, lambda i: (0, 0),
                            pipeline_mode=pl.Buffered(1))

    out = pl.pallas_call(
        generator_kernel,
        out_shape=jax.ShapeDtypeStruct((B_pad, out_dim_pad), out_dtype),
        grid_spec=pltpu.PrefetchScalarGridSpec(
            num_scalar_prefetch=0,
            grid=(num_tiles,),
            in_specs=[
                pl.BlockSpec((tile, in_dim_pad), lambda i: (i, 0)),  # x tile
                const_spec(w1), const_spec(b1),
                const_spec(w2), const_spec(b2),
                const_spec(w3), const_spec(b3),
                const_spec(w4), const_spec(b4),
            ],
            out_specs=pl.BlockSpec((tile, out_dim_pad), lambda i: (i, 0)),
        ),
        compiler_params=pltpu.CompilerParams(
            dimension_semantics=("parallel",),
            # ~7-8 MiB actually needed even at tile=1024; 32 MiB leaves
            # headroom on v7x's 64 MiB physical VMEM.
            vmem_limit_bytes=32 << 20,
        ),
    )(x, w1, b1, w2, b2, w3, b3, w4, b4)

    # Slice off padded tail rows and padded output lanes.
    return out[:B, :out_dim]


def generator_forward(x, params, tile_m=1024, matmul_dtype=jnp.bfloat16):
    """x: (B, g_input_dim) float32. params: dict of transposed weights + biases."""
    two_tc, bf16_vpu = _device_info()
    act_dtype = jnp.bfloat16 if (bf16_vpu and matmul_dtype == jnp.bfloat16) \
        else jnp.float32
    return _generator_forward_impl(
        x, params, tile_m=int(tile_m), matmul_dtype=matmul_dtype,
        act_dtype=act_dtype, two_tc=two_tc)


def init_generator_params(key, g_input_dim, g_output_dim, dtype=jnp.float32):
    """Deterministic init mimicking PyTorch nn.Linear default:
    uniform(-1/sqrt(fan_in), 1/sqrt(fan_in)). Weights stored as (in, out)."""
    dims = [g_input_dim, 256, 512, 1024, g_output_dim]
    params = {}
    for layer in range(4):
        fan_in, fan_out = dims[layer], dims[layer + 1]
        key, kw, kb = jax.random.split(key, 3)
        bound = 1.0 / (fan_in ** 0.5)
        params[f"w{layer+1}"] = jax.random.uniform(
            kw, (fan_in, fan_out), dtype=dtype, minval=-bound, maxval=bound)
        params[f"b{layer+1}"] = jax.random.uniform(
            kb, (fan_out,), dtype=dtype, minval=-bound, maxval=bound)
    return params


def generator_reference(x, params, matmul_dtype=jnp.float32,
                        act_dtype=jnp.float32):
    """Pure-JAX reference mirroring the kernel's cast points."""
    def mm(h, w):
        return jnp.dot(h.astype(matmul_dtype), w.astype(matmul_dtype),
                       preferred_element_type=jnp.float32)

    def act(z, b):
        return _leaky_relu(z.astype(act_dtype) + b.astype(act_dtype))

    h = act(mm(x, params["w1"]), params["b1"])
    h = act(mm(h, params["w2"]), params["b2"])
    h = act(mm(h, params["w3"]), params["b3"])
    return jnp.tanh(mm(h, params["w4"]) + params["b4"].astype(jnp.float32))


if __name__ == "__main__":
    key = jax.random.PRNGKey(0)
    k_params, k_x, k_x2, k_x3 = jax.random.split(key, 4)

    g_input_dim = 64     # latent dim (padded to 128 for the fc1 contraction)
    g_output_dim = 100   # non-multiple-of-128 -> exercises lane-dense out padding

    params = init_generator_params(k_params, g_input_dim, g_output_dim)

    _, bf16_vpu = _device_info()
    act_dtype = jnp.bfloat16 if bf16_vpu else jnp.float32

    def check(x, out, atol_mirror=1e-2, atol_f32=6e-2):
        ref_mirror = generator_reference(x, params, matmul_dtype=jnp.bfloat16,
                                         act_dtype=act_dtype)
        ref_f32 = generator_reference(x, params)
        assert out.shape == ref_f32.shape, (out.shape, ref_f32.shape)
        err_m = float(jnp.max(jnp.abs(out - ref_mirror)))
        err_f = float(jnp.max(jnp.abs(out - ref_f32)))
        assert err_m < atol_mirror, ("mirror err", err_m)
        assert err_f < atol_f32, ("f32 err", err_f)

    # Small batch (single tile).
    x = jax.random.normal(k_x, (16, g_input_dim), dtype=jnp.float32)
    out = jax.block_until_ready(generator_forward(x, params))
    check(x, out)

    # Ragged batch (not a multiple of 8): pad + slice path.
    x2 = jax.random.normal(k_x2, (13, g_input_dim), dtype=jnp.float32)
    out2 = jax.block_until_ready(generator_forward(x2, params))
    check(x2, out2)

    # Multi-tile grid: small tile_m forces 3 grid steps + a zero-padded tail tile.
    x3 = jax.random.normal(k_x3, (40, g_input_dim), dtype=jnp.float32)
    out3 = jax.block_until_ready(generator_forward(x3, params, tile_m=16))
    check(x3, out3)

    print("KERNEL_OK")
</pallas_src>

<mosaic_0001>
module attributes {stable_mosaic.version = 11 : i64} {
  func.func @generator_kernel(%arg0: i32, %arg1: memref<16x128xf32, #tpu.memory_space<vmem>>, %arg2: memref<128x256xbf16, #tpu.memory_space<vmem>>, %arg3: memref<1x256xbf16, #tpu.memory_space<vmem>>, %arg4: memref<256x512xbf16, #tpu.memory_space<vmem>>, %arg5: memref<1x512xbf16, #tpu.memory_space<vmem>>, %arg6: memref<512x1024xbf16, #tpu.memory_space<vmem>>, %arg7: memref<1x1024xbf16, #tpu.memory_space<vmem>>, %arg8: memref<1024x128xbf16, #tpu.memory_space<vmem>>, %arg9: memref<1x128xf32, #tpu.memory_space<vmem>>, %arg10: memref<16x128xf32, #tpu.memory_space<vmem>>) attributes {dimension_semantics = [#tpu.dimension_semantics<parallel>], iteration_bounds = array<i64: 1>, scalar_prefetch = 0 : i64, scratch_operands = 0 : i64, tpu.core_type = #tpu.core_type<tc>, window_params = [{transform_indices = @transform_0, window_bounds = array<i64: 16, 128>}, {pipeline_mode = #tpu.pipeline_mode<synchronous>, transform_indices = @transform_1, window_bounds = array<i64: 128, 256>}, {pipeline_mode = #tpu.pipeline_mode<synchronous>, transform_indices = @transform_2, window_bounds = array<i64: 1, 256>}, {pipeline_mode = #tpu.pipeline_mode<synchronous>, transform_indices = @transform_3, window_bounds = array<i64: 256, 512>}, {pipeline_mode = #tpu.pipeline_mode<synchronous>, transform_indices = @transform_4, window_bounds = array<i64: 1, 512>}, {pipeline_mode = #tpu.pipeline_mode<synchronous>, transform_indices = @transform_5, window_bounds = array<i64: 512, 1024>}, {pipeline_mode = #tpu.pipeline_mode<synchronous>, transform_indices = @transform_6, window_bounds = array<i64: 1, 1024>}, {pipeline_mode = #tpu.pipeline_mode<synchronous>, transform_indices = @transform_7, window_bounds = array<i64: 1024, 128>}, {pipeline_mode = #tpu.pipeline_mode<synchronous>, transform_indices = @transform_8, window_bounds = array<i64: 1, 128>}, {transform_indices = @transform_9, window_bounds = array<i64: 16, 128>}]} {
    %c0 = arith.constant 0 : index
    %c0_0 = arith.constant 0 : index
    %0 = vector.load %arg1[%c0, %c0_0] : memref<16x128xf32, #tpu.memory_space<vmem>>, vector<16x128xf32>
    %1 = arith.truncf %0 : vector<16x128xf32> to vector<16x128xbf16>
    %c0_1 = arith.constant 0 : index
    %c0_2 = arith.constant 0 : index
    %2 = vector.load %arg2[%c0_1, %c0_2] : memref<128x256xbf16, #tpu.memory_space<vmem>>, vector<128x256xbf16>
    %cst = arith.constant dense<0.000000e+00> : vector<16x256xf32>
    %3 = tpu.matmul %1, %2, %cst {dimension_numbers = #tpu.dot_dimension_numbers<[1], [0], [0], [1], [0, 0, 1, 1], [], []>} : vector<16x128xbf16>, vector<128x256xbf16>, vector<16x256xf32> -> vector<16x256xf32>
    %4 = arith.truncf %3 : vector<16x256xf32> to vector<16x256xbf16>
    %c0_3 = arith.constant 0 : index
    %c0_4 = arith.constant 0 : index
    %5 = vector.load %arg3[%c0_3, %c0_4] : memref<1x256xbf16, #tpu.memory_space<vmem>>, vector<1x256xbf16>
    %6 = vector.broadcast %5 : vector<1x256xbf16> to vector<16x256xbf16>
    %7 = arith.addf %4, %6 : vector<16x256xbf16>
    %cst_5 = arith.constant 0.000000e+00 : bf16
    %8 = vector.broadcast %cst_5 : bf16 to vector<16x256xbf16>
    %9 = arith.cmpf ogt, %7, %8 : vector<16x256xbf16>
    %cst_6 = arith.constant 2.001950e-01 : bf16
    %10 = vector.broadcast %cst_6 : bf16 to vector<16x256xbf16>
    %11 = arith.mulf %10, %7 : vector<16x256xbf16>
    %12 = arith.select %9, %7, %11 : vector<16x256xi1>, vector<16x256xbf16>
    %c0_7 = arith.constant 0 : index
    %c0_8 = arith.constant 0 : index
    %13 = vector.load %arg4[%c0_7, %c0_8] : memref<256x512xbf16, #tpu.memory_space<vmem>>, vector<256x512xbf16>
    %cst_9 = arith.constant dense<0.000000e+00> : vector<16x512xf32>
    %14 = tpu.matmul %12, %13, %cst_9 {dimension_numbers = #tpu.dot_dimension_numbers<[1], [0], [0], [1], [0, 0, 1, 1], [], []>} : vector<16x256xbf16>, vector<256x512xbf16>, vector<16x512xf32> -> vector<16x512xf32>
    %15 = arith.truncf %14 : vector<16x512xf32> to vector<16x512xbf16>
    %c0_10 = arith.constant 0 : index
    %c0_11 = arith.constant 0 : index
    %16 = vector.load %arg5[%c0_10, %c0_11] : memref<1x512xbf16, #tpu.memory_space<vmem>>, vector<1x512xbf16>
    %17 = vector.broadcast %16 : vector<1x512xbf16> to vector<16x512xbf16>
    %18 = arith.addf %15, %17 : vector<16x512xbf16>
    %cst_12 = arith.constant 0.000000e+00 : bf16
    %19 = vector.broadcast %cst_12 : bf16 to vector<16x512xbf16>
    %20 = arith.cmpf ogt, %18, %19 : vector<16x512xbf16>
    %cst_13 = arith.constant 2.001950e-01 : bf16
    %21 = vector.broadcast %cst_13 : bf16 to vector<16x512xbf16>
    %22 = arith.mulf %21, %18 : vector<16x512xbf16>
    %23 = arith.select %20, %18, %22 : vector<16x512xi1>, vector<16x512xbf16>
    %c0_14 = arith.constant 0 : index
    %c0_15 = arith.constant 0 : index
    %24 = vector.load %arg6[%c0_14, %c0_15] : memref<512x1024xbf16, #tpu.memory_space<vmem>>, vector<512x1024xbf16>
    %cst_16 = arith.constant dense<0.000000e+00> : vector<16x1024xf32>
    %25 = tpu.matmul %23, %24, %cst_16 {dimension_numbers = #tpu.dot_dimension_numbers<[1], [0], [0], [1], [0, 0, 1, 1], [], []>} : vector<16x512xbf16>, vector<512x1024xbf16>, vector<16x1024xf32> -> vector<16x1024xf32>
    %26 = arith.truncf %25 : vector<16x1024xf32> to vector<16x1024xbf16>
    %c0_17 = arith.constant 0 : index
    %c0_18 = arith.constant 0 : index
    %27 = vector.load %arg7[%c0_17, %c0_18] : memref<1x1024xbf16, #tpu.memory_space<vmem>>, vector<1x1024xbf16>
    %28 = vector.broadcast %27 : vector<1x1024xbf16> to vector<16x1024xbf16>
    %29 = arith.addf %26, %28 : vector<16x1024xbf16>
    %cst_19 = arith.constant 0.000000e+00 : bf16
    %30 = vector.broadcast %cst_19 : bf16 to vector<16x1024xbf16>
    %31 = arith.cmpf ogt, %29, %30 : vector<16x1024xbf16>
    %cst_20 = arith.constant 2.001950e-01 : bf16
    %32 = vector.broadcast %cst_20 : bf16 to vector<16x1024xbf16>
    %33 = arith.mulf %32, %29 : vector<16x1024xbf16>
    %34 = arith.select %31, %29, %33 : vector<16x1024xi1>, vector<16x1024xbf16>
    %c0_21 = arith.constant 0 : index
    %c0_22 = arith.constant 0 : index
    %35 = vector.load %arg8[%c0_21, %c0_22] : memref<1024x128xbf16, #tpu.memory_space<vmem>>, vector<1024x128xbf16>
    %cst_23 = arith.constant dense<0.000000e+00> : vector<16x128xf32>
    %36 = tpu.matmul %34, %35, %cst_23 {dimension_numbers = #tpu.dot_dimension_numbers<[1], [0], [0], [1], [0, 0, 1, 1], [], []>} : vector<16x1024xbf16>, vector<1024x128xbf16>, vector<16x128xf32> -> vector<16x128xf32>
    %c0_24 = arith.constant 0 : index
    %c0_25 = arith.constant 0 : index
    %37 = vector.load %arg9[%c0_24, %c0_25] : memref<1x128xf32, #tpu.memory_space<vmem>>, vector<1x128xf32>
    %38 = vector.broadcast %37 : vector<1x128xf32> to vector<16x128xf32>
    %39 = arith.addf %36, %38 : vector<16x128xf32>
    %40 = math.tanh %39 : vector<16x128xf32>
    %c0_26 = arith.constant 0 : index
    %c0_27 = arith.constant 0 : index
    %41 = vector.load %arg10[%c0_26, %c0_27] : memref<16x128xf32, #tpu.memory_space<vmem>>, vector<16x128xf32>
    tpu.vector_store %arg10[%c0_26, %c0_27], %40 {strides = array<i32>} : memref<16x128xf32, #tpu.memory_space<vmem>>, vector<16x128xf32>,
    return
  }
  func.func @transform_0(%arg0: i32) -> (i32, i32) {
    %c0_i32 = arith.constant 0 : i32
    %c0_i32_0 = arith.constant 0 : i32
    return %arg0, %c0_i32 : i32, i32
  }
  func.func @transform_1(%arg0: i32) -> (i32, i32) {
    %c0_i32 = arith.constant 0 : i32
    %c0_i32_0 = arith.constant 0 : i32
    %c0_i32_1 = arith.constant 0 : i32
    return %c0_i32, %c0_i32_0 : i32, i32
  }
  func.func @transform_2(%arg0: i32) -> (i32, i32) {
    %c0_i32 = arith.constant 0 : i32
    %c0_i32_0 = arith.constant 0 : i32
    %c0_i32_1 = arith.constant 0 : i32
    return %c0_i32, %c0_i32_0 : i32, i32
  }
  func.func @transform_3(%arg0: i32) -> (i32, i32) {
    %c0_i32 = arith.constant 0 : i32
    %c0_i32_0 = arith.constant 0 : i32
    %c0_i32_1 = arith.constant 0 : i32
    return %c0_i32, %c0_i32_0 : i32, i32
  }
  func.func @transform_4(%arg0: i32) -> (i32, i32) {
    %c0_i32 = arith.constant 0 : i32
    %c0_i32_0 = arith.constant 0 : i32
    %c0_i32_1 = arith.constant 0 : i32
    return %c0_i32, %c0_i32_0 : i32, i32
  }
  func.func @transform_5(%arg0: i32) -> (i32, i32) {
    %c0_i32 = arith.constant 0 : i32
    %c0_i32_0 = arith.constant 0 : i32
    %c0_i32_1 = arith.constant 0 : i32
    return %c0_i32, %c0_i32_0 : i32, i32
  }
  func.func @transform_6(%arg0: i32) -> (i32, i32) {
    %c0_i32 = arith.constant 0 : i32
    %c0_i32_0 = arith.constant 0 : i32
    %c0_i32_1 = arith.constant 0 : i32
    return %c0_i32, %c0_i32_0 : i32, i32
  }
  func.func @transform_7(%arg0: i32) -> (i32, i32) {
    %c0_i32 = arith.constant 0 : i32
    %c0_i32_0 = arith.constant 0 : i32
    %c0_i32_1 = arith.constant 0 : i32
    return %c0_i32, %c0_i32_0 : i32, i32
  }
  func.func @transform_8(%arg0: i32) -> (i32, i32) {
    %c0_i32 = arith.constant 0 : i32
    %c0_i32_0 = arith.constant 0 : i32
    %c0_i32_1 = arith.constant 0 : i32
    return %c0_i32, %c0_i32_0 : i32, i32
  }
  func.func @transform_9(%arg0: i32) -> (i32, i32) {
    %c0_i32 = arith.constant 0 : i32
    %c0_i32_0 = arith.constant 0 : i32
    return %arg0, %c0_i32 : i32, i32
  }
}

</mosaic_0001>

<llo_original>
// kernel: _generator_forward_impl.1
$region0: #{_generator_forward_impl.1}
  #allocation0 [shape = 'u32[]', space=smem, size = 0x4, offset = 0x4, fixed_abs, tag = 'smem constant byte address 0x4 - core index']
  #allocation1 [shape = 'u32[144,128]{1,0:T(1,128)}', space=vmem, size = 0x12000, scoped, tag = 'internal scratch']
  %s0 = inlined_call_operand.vmem [shape: f32[16,128], index: 0, kind: input, shape index: {}]
  %s1 = inlined_call_operand.vmem [shape: bf16[128,256], index: 1, kind: input, shape index: {}]
  %s2 = inlined_call_operand.vmem [shape: bf16[1,256], index: 2, kind: input, shape index: {}]
  %s3 = inlined_call_operand.vmem [shape: bf16[256,512], index: 3, kind: input, shape index: {}]
  %s4 = inlined_call_operand.vmem [shape: bf16[1,512], index: 4, kind: input, shape index: {}]
  %s5 = inlined_call_operand.vmem [shape: bf16[512,1024], index: 5, kind: input, shape index: {}]
  %s6 = inlined_call_operand.vmem [shape: bf16[1,1024], index: 6, kind: input, shape index: {}]
  %s7 = inlined_call_operand.vmem [shape: bf16[1024,128], index: 7, kind: input, shape index: {}]
  %s8 = inlined_call_operand.vmem [shape: f32[1,128], index: 8, kind: input, shape index: {}]
  %s9 = inlined_call_operand.hbm [shape: f32[16,128], index: 9, kind: output, shape index: {}]
  %s10 = sld [smem:[#allocation0]]
  $region46: #{_generator_forward_impl.1} parent=0
    _
  %s12 = ssub.s32 1, %s10
  %s13 = scalar_select 0, %s12, %s10
  $region1: #{_generator_forward_impl.1} parent=0
    #allocation2 [shape = 'u8[8192]{0}', space=vmem, size = 0x2000, scoped, tag = 'output window, operand 0, single buffered']
    #allocation3 [shape = 's32[1]{0}', space=sflag, size = 0x4, scoped, tag = 'scoped memory for _generator_forward_impl.1']
    %14 = vsyncpa [#allocation3], 0
    // Predicated region
    $region2: #{_generator_forward_impl.1} parent=1 // pred_check
      _
    $region3: #{_generator_forward_impl.1} parent=1 // pred_check_branch
      %16 = sbr.rel (0) target = $region5
    $region4: #{_generator_forward_impl.1} parent=1 // pred_region
      _
    $region5: #{_generator_forward_impl.1} parent=1 // pred_fallthru
      _
    // Predicated region
    $region6: #{_generator_forward_impl.1} parent=1 // pred_check
      _
    $region7: #{_generator_forward_impl.1} parent=1 // pred_check_branch
      %18 = sbr.rel (0) target = $region9
    $region8: #{_generator_forward_impl.1} parent=1 // pred_region
      _
    $region9: #{_generator_forward_impl.1} parent=1 // pred_fallthru
      _
    // Predicated region
    $region10: #{_generator_forward_impl.1} parent=1 // pred_check
      _
    $region11: #{_generator_forward_impl.1} parent=1 // pred_check_branch
      %20 = sbr.rel (0) target = $region13
    $region12: #{_generator_forward_impl.1} parent=1 // pred_region
      _
    $region13: #{_generator_forward_impl.1} parent=1 // pred_fallthru
      _
    // Predicated region
    $region14: #{_generator_forward_impl.1} parent=1 // pred_check
      _
    $region15: #{_generator_forward_impl.1} parent=1 // pred_check_branch
      %22 = sbr.rel (0) target = $region17
    $region16: #{_generator_forward_impl.1} parent=1 // pred_region
      _
    $region17: #{_generator_forward_impl.1} parent=1 // pred_fallthru
      _
    // Predicated region
    $region18: #{_generator_forward_impl.1} parent=1 // pred_check
      _
    $region19: #{_generator_forward_impl.1} parent=1 // pred_check_branch
      %24 = sbr.rel (0) target = $region21
    $region20: #{_generator_forward_impl.1} parent=1 // pred_region
      _
    $region21: #{_generator_forward_impl.1} parent=1 // pred_fallthru
      _
    // Predicated region
    $region22: #{_generator_forward_impl.1} parent=1 // pred_check
      _
    $region23: #{_generator_forward_impl.1} parent=1 // pred_check_branch
      %26 = sbr.rel (0) target = $region25
    $region24: #{_generator_forward_impl.1} parent=1 // pred_region
      _
    $region25: #{_generator_forward_impl.1} parent=1 // pred_fallthru
      _
    // Predicated region
    $region26: #{_generator_forward_impl.1} parent=1 // pred_check
      _
    $region27: #{_generator_forward_impl.1} parent=1 // pred_check_branch
      %28 = sbr.rel (0) target = $region29
    $region28: #{_generator_forward_impl.1} parent=1 // pred_region
      _
    $region29: #{_generator_forward_impl.1} parent=1 // pred_fallthru
      _
    // Predicated region
    $region30: #{_generator_forward_impl.1} parent=1 // pred_check
      _
    $region31: #{_generator_forward_impl.1} parent=1 // pred_check_branch
      %30 = sbr.rel (0) target = $region33
    $region32: #{_generator_forward_impl.1} parent=1 // pred_region
      _
    $region33: #{_generator_forward_impl.1} parent=1 // pred_fallthru
      _
    // Predicated region
    $region34: #{_generator_forward_impl.1} parent=1 // pred_check
      _
    $region35: #{_generator_forward_impl.1} parent=1 // pred_check_branch
      %32 = sbr.rel (0) target = $region37
    $region36: #{_generator_forward_impl.1} parent=1 // pred_region
      _
    $region37: #{_generator_forward_impl.1} parent=1 // pred_fallthru
      _
    %v35 = vld [vmem:[%s0] sm:$0xff]
    %v36 = vld [vmem:[%s0 + $0x8] sm:$0xff]
    %v37 = vpack.c.bf16 %v36, %v35
    %v38 = vld [vmem:[%s1] sm:$0xff]
    %v39 = vld [vmem:[%s1 + $0x8] sm:$0xff]
    %v40 = vld [vmem:[%s1 + $0x10] sm:$0xff]
    %v41 = vld [vmem:[%s1 + $0x18] sm:$0xff]
    %v42 = vld [vmem:[%s1 + $0x20] sm:$0xff]
    %v43 = vld [vmem:[%s1 + $0x28] sm:$0xff]
    %v44 = vld [vmem:[%s1 + $0x30] sm:$0xff]
    %v45 = vld [vmem:[%s1 + $0x38] sm:$0xff]
    %v46 = vld [vmem:[%s1 + $0x40] sm:$0xff]
    %v47 = vld [vmem:[%s1 + $0x48] sm:$0xff]
    %v48 = vld [vmem:[%s1 + $0x50] sm:$0xff]
    %v49 = vld [vmem:[%s1 + $0x58] sm:$0xff]
    %v50 = vld [vmem:[%s1 + $0x60] sm:$0xff]
    %v51 = vld [vmem:[%s1 + $0x68] sm:$0xff]
    %v52 = vld [vmem:[%s1 + $0x70] sm:$0xff]
    %v53 = vld [vmem:[%s1 + $0x78] sm:$0xff]
    %v70 = vunpack.c.l.b16 %v38
    %v71 = vunpack.c.h.b16 %v38
    %v72 = vunpack.c.l.b16 %v39
    %v73 = vunpack.c.h.b16 %v39
    %v74 = vunpack.c.l.b16 %v40
    %v75 = vunpack.c.h.b16 %v40
    %v76 = vunpack.c.l.b16 %v41
    %v77 = vunpack.c.h.b16 %v41
    %v78 = vunpack.c.l.b16 %v42
    %v79 = vunpack.c.h.b16 %v42
    %v80 = vunpack.c.l.b16 %v43
    %v81 = vunpack.c.h.b16 %v43
    %v82 = vunpack.c.l.b16 %v44
    %v83 = vunpack.c.h.b16 %v44
    %v84 = vunpack.c.l.b16 %v45
    %v85 = vunpack.c.h.b16 %v45
    %v86 = vunpack.c.l.b16 %v46
    %v87 = vunpack.c.h.b16 %v46
    %v88 = vunpack.c.l.b16 %v47
    %v89 = vunpack.c.h.b16 %v47
    %v90 = vunpack.c.l.b16 %v48
    %v91 = vunpack.c.h.b16 %v48
    %v92 = vunpack.c.l.b16 %v49
    %v93 = vunpack.c.h.b16 %v49
    %v94 = vunpack.c.l.b16 %v50
    %v95 = vunpack.c.h.b16 %v50
    %v96 = vunpack.c.l.b16 %v51
    %v97 = vunpack.c.h.b16 %v51
    %v98 = vunpack.c.l.b16 %v52
    %v99 = vunpack.c.h.b16 %v52
    %v100 = vunpack.c.l.b16 %v53
    %v101 = vunpack.c.h.b16 %v53
    %v102 = vpack.c.b16 %v72, %v70
    %v103 = vpack.c.b16 %v73, %v71
    %v104 = vpack.c.b16 %v76, %v74
    %v105 = vpack.c.b16 %v77, %v75
    %v106 = vpack.c.b16 %v80, %v78
    %v107 = vpack.c.b16 %v81, %v79
    %v108 = vpack.c.b16 %v84, %v82
    %v109 = vpack.c.b16 %v85, %v83
    %v110 = vpack.c.b16 %v88, %v86
    %v111 = vpack.c.b16 %v89, %v87
    %v112 = vpack.c.b16 %v92, %v90
    %v113 = vpack.c.b16 %v93, %v91
    %v114 = vpack.c.b16 %v96, %v94
    %v115 = vpack.c.b16 %v97, %v95
    %v116 = vpack.c.b16 %v100, %v98
    %v117 = vpack.c.b16 %v101, %v99
    %134 = vmatprep.subr.bf16.mxu0 %v103
    %135 = vmatpush1.bf16.msra.mxu0 %v102
    %136 = vmatprep.subr.bf16.mxu0 %v105
    %137 = vmatpush1.bf16.msra.mxu0 %v104
    %138 = vmatprep.subr.bf16.mxu0 %v107
    %139 = vmatpush1.bf16.msra.mxu0 %v106
    %140 = vmatprep.subr.bf16.mxu0 %v109
    %141 = vmatpush1.bf16.msra.mxu0 %v108
    %142 = vmatprep.subr.bf16.mxu0 %v111
    %143 = vmatpush1.bf16.msra.mxu0 %v110
    %144 = vmatprep.subr.bf16.mxu0 %v113
    %145 = vmatpush1.bf16.msra.mxu0 %v112
    %146 = vmatprep.subr.bf16.mxu0 %v115
    %147 = vmatpush1.bf16.msra.mxu0 %v114
    %148 = vmatprep.subr.bf16.mxu0 %v117
    %149 = vmatpush1.bf16.msra.mxu0 %v116
    %150 = vmatprep.subr.bf16.mxu0 0
    %151 = vmatpush1.bf16.msra.mxu0 0
    %152 = vmatprep.subr.bf16.mxu0 0
    %153 = vmatpush1.bf16.msra.mxu0 0
    %154 = vmatprep.subr.bf16.mxu0 0
    %155 = vmatpush1.bf16.msra.mxu0 0
    %156 = vmatprep.subr.bf16.mxu0 0
    %157 = vmatpush1.bf16.msra.mxu0 0
    %158 = vmatprep.subr.bf16.mxu0 0
    %159 = vmatpush1.bf16.msra.mxu0 0
    %160 = vmatprep.subr.bf16.mxu0 0
    %161 = vmatpush1.bf16.msra.mxu0 0
    %162 = vmatprep.subr.bf16.mxu0 0
    %163 = vmatpush1.bf16.msra.mxu0 0
    %164 = vmatprep.subr.bf16.mxu0 0
    %165 = vmatpush1.bf16.msra.mxu0 0
    %166 = vmatprep.mubr.bf16.mxu0 0
    %167 = vmatmul.mubr.bf16.gmra.mrb[0].mxu0 %v37
    %v168 = vpop.f32.mrb[0].mxu0
    %v169 = vadd.f32 0.0, %v168
    %v170 = vpop.f32.mrb[0].mxu0
    %v171 = vadd.f32 0.0, %v170
    %v172 = vpop.f32.mrb[0].mxu0
    %v173 = vadd.f32 0.0, %v172
    %v174 = vpop.f32.mrb[0].mxu0
    %v175 = vadd.f32 0.0, %v174
    %176 = vdwg.mxu0
    %v177 = vpack.c.bf16 %v173, %v169
    %v178 = vpack.c.bf16 %v175, %v171
    %v179 = vld [vmem:[%s2] sm:$0x3]
    %v182 = vunpack.c.l.s4 1966171168
    %v183 = vunpack.c.0.s8 %v182
    %v184 = vlaneseq
    %v185 = vshrl.u32 %v184, 7
    %v186 = vsub.s32 %v183, %v185
    %v187 = vrot.slane %v179, %v186
    %v188 = vcombine.high %v187, %v187
    %v190 = vunpack.c.l.s4 1966171168
    %v191 = vunpack.c.0.s8 %v190
    %v192 = vlaneseq
    %v193 = vshrl.u32 %v192, 7
    %v194 = vsub.s32 %v191, %v193
    %v195 = vrot.slane %v187, %v194
    %v197 = vunpack.c.l.s4 1966171168
    %v198 = vunpack.c.0.s8 %v197
    %v199 = vlaneseq
    %v200 = vshrl.u32 %v199, 7
    %v201 = vsub.s32 %v198, %v200
    %v202 = vrot.slane %v188, %v201
    %v204 = vpack.i.b16 %v195, %v195
    %v206 = vlaneseq
    %v207 = vshrl.u32 %v206, 7
    %v208 = vsub.s32 0, %v207
    %v209 = vrot.slane %v204, %v208
    %v211 = vpack.i.b16 %v202, %v202
    %v213 = vlaneseq
    %v214 = vshrl.u32 %v213, 7
    %v215 = vsub.s32 0, %v214
    %v216 = vrot.slane %v211, %v215
    %v217 = vadd.bf16 %v177, %v209
    %v218 = vadd.bf16 %v178, %v216
    %vm219 = vcmp.gt.bf16.partialorder %v217, 0
    %vm220 = vcmp.gt.bf16.partialorder %v218, 0
    %v221 = vmul.bf16 %v217, 1045249613
    %v222 = vmul.bf16 %v218, 1045249613
    %v223 = vsel %vm219, %v217, %v221
    %v224 = vsel %vm220, %v218, %v222
    %v225 = vld [vmem:[%s3] sm:$0xff]
    %v226 = vld [vmem:[%s3 + $0x8] sm:$0xff]
    %v227 = vld [vmem:[%s3 + $0x10] sm:$0xff]
    %v228 = vld [vmem:[%s3 + $0x18] sm:$0xff]
    %v229 = vld [vmem:[%s3 + $0x20] sm:$0xff]
    %v230 = vld [vmem:[%s3 + $0x28] sm:$0xff]
    %v231 = vld [vmem:[%s3 + $0x30] sm:$0xff]
    %v232 = vld [vmem:[%s3 + $0x38] sm:$0xff]
    %v233 = vld [vmem:[%s3 + $0x40] sm:$0xff]
    %v234 = vld [vmem:[%s3 + $0x48] sm:$0xff]
    %v235 = vld [vmem:[%s3 + $0x50] sm:$0xff]
    %v236 = vld [vmem:[%s3 + $0x58] sm:$0xff]
    %v237 = vld [vmem:[%s3 + $0x60] sm:$0xff]
    %v238 = vld [vmem:[%s3 + $0x68] sm:$0xff]
    %v239 = vld [vmem:[%s3 + $0x70] sm:$0xff]
    %v240 = vld [vmem:[%s3 + $0x78] sm:$0xff]
    %v241 = vld [vmem:[%s3 + $0x80] sm:$0xff]
    %v242 = vld [vmem:[%s3 + $0x88] sm:$0xff]
    %v243 = vld [vmem:[%s3 + $0x90] sm:$0xff]
    %v244 = vld [vmem:[%s3 + $0x98] sm:$0xff]
    %v245 = vld [vmem:[%s3 + $0xa0] sm:$0xff]
    %v246 = vld [vmem:[%s3 + $0xa8] sm:$0xff]
    %v247 = vld [vmem:[%s3 + $0xb0] sm:$0xff]
    %v248 = vld [vmem:[%s3 + $0xb8] sm:$0xff]
    %v249 = vld [vmem:[%s3 + $0xc0] sm:$0xff]
    %v250 = vld [vmem:[%s3 + $0xc8] sm:$0xff]
    %v251 = vld [vmem:[%s3 + $0xd0] sm:$0xff]
    %v252 = vld [vmem:[%s3 + $0xd8] sm:$0xff]
    %v253 = vld [vmem:[%s3 + $0xe0] sm:$0xff]
    %v254 = vld [vmem:[%s3 + $0xe8] sm:$0xff]
    %v255 = vld [vmem:[%s3 + $0xf0] sm:$0xff]
    %v256 = vld [vmem:[%s3 + $0xf8] sm:$0xff]
    %v257 = vld [vmem:[%s3 + $0x100] sm:$0xff]
    %v258 = vld [vmem:[%s3 + $0x108] sm:$0xff]
    %v259 = vld [vmem:[%s3 + $0x110] sm:$0xff]
    %v260 = vld [vmem:[%s3 + $0x118] sm:$0xff]
    %v261 = vld [vmem:[%s3 + $0x120] sm:$0xff]
    %v262 = vld [vmem:[%s3 + $0x128] sm:$0xff]
    %v263 = vld [vmem:[%s3 + $0x130] sm:$0xff]
    %v264 = vld [vmem:[%s3 + $0x138] sm:$0xff]
    %v265 = vld [vmem:[%s3 + $0x140] sm:$0xff]
    %v266 = vld [vmem:[%s3 + $0x148] sm:$0xff]
    %v267 = vld [vmem:[%s3 + $0x150] sm:$0xff]
    %v268 = vld [vmem:[%s3 + $0x158] sm:$0xff]
    %v269 = vld [vmem:[%s3 + $0x160] sm:$0xff]
    %v270 = vld [vmem:[%s3 + $0x168] sm:$0xff]
    %v271 = vld [vmem:[%s3 + $0x170] sm:$0xff]
    %v272 = vld [vmem:[%s3 + $0x178] sm:$0xff]
    %v273 = vld [vmem:[%s3 + $0x180] sm:$0xff]
    %v274 = vld [vmem:[%s3 + $0x188] sm:$0xff]
    %v275 = vld [vmem:[%s3 + $0x190] sm:$0xff]
    %v276 = vld [vmem:[%s3 + $0x198] sm:$0xff]
    %v277 = vld [vmem:[%s3 + $0x1a0] sm:$0xff]
    %v278 = vld [vmem:[%s3 + $0x1a8] sm:$0xff]
    %v279 = vld [vmem:[%s3 + $0x1b0] sm:$0xff]
    %v280 = vld [vmem:[%s3 + $0x1b8] sm:$0xff]
    %v281 = vld [vmem:[%s3 + $0x1c0] sm:$0xff]
    %v282 = vld [vmem:[%s3 + $0x1c8] sm:$0xff]
    %v283 = vld [vmem:[%s3 + $0x1d0] sm:$0xff]
    %v284 = vld [vmem:[%s3 + $0x1d8] sm:$0xff]
    %v285 = vld [vmem:[%s3 + $0x1e0] sm:$0xff]
    %v286 = vld [vmem:[%s3 + $0x1e8] sm:$0xff]
    %v287 = vld [vmem:[%s3 + $0x1f0] sm:$0xff]
    %v288 = vld [vmem:[%s3 + $0x1f8] sm:$0xff]
    %v353 = vunpack.c.l.b16 %v225
    %v354 = vunpack.c.h.b16 %v225
    %v355 = vunpack.c.l.b16 %v226
    %v356 = vunpack.c.h.b16 %v226
    %v357 = vunpack.c.l.b16 %v227
    %v358 = vunpack.c.h.b16 %v227
    %v359 = vunpack.c.l.b16 %v228
    %v360 = vunpack.c.h.b16 %v228
    %v361 = vunpack.c.l.b16 %v229
    %v362 = vunpack.c.h.b16 %v229
    %v363 = vunpack.c.l.b16 %v230
    %v364 = vunpack.c.h.b16 %v230
    %v365 = vunpack.c.l.b16 %v231
    %v366 = vunpack.c.h.b16 %v231
    %v367 = vunpack.c.l.b16 %v232
    %v368 = vunpack.c.h.b16 %v232
    %v369 = vunpack.c.l.b16 %v233
    %v370 = vunpack.c.h.b16 %v233
    %v371 = vunpack.c.l.b16 %v234
    %v372 = vunpack.c.h.b16 %v234
    %v373 = vunpack.c.l.b16 %v235
    %v374 = vunpack.c.h.b16 %v235
    %v375 = vunpack.c.l.b16 %v236
    %v376 = vunpack.c.h.b16 %v236
    %v377 = vunpack.c.l.b16 %v237
    %v378 = vunpack.c.h.b16 %v237
    %v379 = vunpack.c.l.b16 %v238
    %v380 = vunpack.c.h.b16 %v238
    %v381 = vunpack.c.l.b16 %v239
    %v382 = vunpack.c.h.b16 %v239
    %v383 = vunpack.c.l.b16 %v240
    %v384 = vunpack.c.h.b16 %v240
    %v385 = vunpack.c.l.b16 %v241
    %v386 = vunpack.c.h.b16 %v241
    %v387 = vunpack.c.l.b16 %v242
    %v388 = vunpack.c.h.b16 %v242
    %v389 = vunpack.c.l.b16 %v243
    %v390 = vunpack.c.h.b16 %v243
    %v391 = vunpack.c.l.b16 %v244
    %v392 = vunpack.c.h.b16 %v244
    %v393 = vunpack.c.l.b16 %v245
    %v394 = vunpack.c.h.b16 %v245
    %v395 = vunpack.c.l.b16 %v246
    %v396 = vunpack.c.h.b16 %v246
    %v397 = vunpack.c.l.b16 %v247
    %v398 = vunpack.c.h.b16 %v247
    %v399 = vunpack.c.l.b16 %v248
    %v400 = vunpack.c.h.b16 %v248
    %v401 = vunpack.c.l.b16 %v249
    %v402 = vunpack.c.h.b16 %v249
    %v403 = vunpack.c.l.b16 %v250
    %v404 = vunpack.c.h.b16 %v250
    %v405 = vunpack.c.l.b16 %v251
    %v406 = vunpack.c.h.b16 %v251
    %v407 = vunpack.c.l.b16 %v252
    %v408 = vunpack.c.h.b16 %v252
    %v409 = vunpack.c.l.b16 %v253
    %v410 = vunpack.c.h.b16 %v253
    %v411 = vunpack.c.l.b16 %v254
    %v412 = vunpack.c.h.b16 %v254
    %v413 = vunpack.c.l.b16 %v255
    %v414 = vunpack.c.h.b16 %v255
    %v415 = vunpack.c.l.b16 %v256
    %v416 = vunpack.c.h.b16 %v256
    %v417 = vunpack.c.l.b16 %v257
    %v418 = vunpack.c.h.b16 %v257
    %v419 = vunpack.c.l.b16 %v258
    %v420 = vunpack.c.h.b16 %v258
    %v421 = vunpack.c.l.b16 %v259
    %v422 = vunpack.c.h.b16 %v259
    %v423 = vunpack.c.l.b16 %v260
    %v424 = vunpack.c.h.b16 %v260
    %v425 = vunpack.c.l.b16 %v261
    %v426 = vunpack.c.h.b16 %v261
    %v427 = vunpack.c.l.b16 %v262
    %v428 = vunpack.c.h.b16 %v262
    %v429 = vunpack.c.l.b16 %v263
    %v430 = vunpack.c.h.b16 %v263
    %v431 = vunpack.c.l.b16 %v264
    %v432 = vunpack.c.h.b16 %v264
    %v433 = vunpack.c.l.b16 %v265
    %v434 = vunpack.c.h.b16 %v265
    %v435 = vunpack.c.l.b16 %v266
    %v436 = vunpack.c.h.b16 %v266
    %v437 = vunpack.c.l.b16 %v267
    %v438 = vunpack.c.h.b16 %v267
    %v439 = vunpack.c.l.b16 %v268
    %v440 = vunpack.c.h.b16 %v268
    %v441 = vunpack.c.l.b16 %v269
    %v442 = vunpack.c.h.b16 %v269
    %v443 = vunpack.c.l.b16 %v270
    %v444 = vunpack.c.h.b16 %v270
    %v445 = vunpack.c.l.b16 %v271
    %v446 = vunpack.c.h.b16 %v271
    %v447 = vunpack.c.l.b16 %v272
    %v448 = vunpack.c.h.b16 %v272
    %v449 = vunpack.c.l.b16 %v273
    %v450 = vunpack.c.h.b16 %v273
    %v451 = vunpack.c.l.b16 %v274
    %v452 = vunpack.c.h.b16 %v274
    %v453 = vunpack.c.l.b16 %v275
    %v454 = vunpack.c.h.b16 %v275
    %v455 = vunpack.c.l.b16 %v276
    %v456 = vunpack.c.h.b16 %v276
    %v457 = vunpack.c.l.b16 %v277
    %v458 = vunpack.c.h.b16 %v277
    %v459 = vunpack.c.l.b16 %v278
    %v460 = vunpack.c.h.b16 %v278
    %v461 = vunpack.c.l.b16 %v279
    %v462 = vunpack.c.h.b16 %v279
    %v463 = vunpack.c.l.b16 %v280
    %v464 = vunpack.c.h.b16 %v280
    %v465 = vunpack.c.l.b16 %v281
    %v466 = vunpack.c.h.b16 %v281
    %v467 = vunpack.c.l.b16 %v282
    %v468 = vunpack.c.h.b16 %v282
    %v469 = vunpack.c.l.b16 %v283
    %v470 = vunpack.c.h.b16 %v283
    %v471 = vunpack.c.l.b16 %v284
    %v472 = vunpack.c.h.b16 %v284
    %v473 = vunpack.c.l.b16 %v285
    %v474 = vunpack.c.h.b16 %v285
    %v475 = vunpack.c.l.b16 %v286
    %v476 = vunpack.c.h.b16 %v286
    %v477 = vunpack.c.l.b16 %v287
    %v478 = vunpack.c.h.b16 %v287
    %v479 = vunpack.c.l.b16 %v288
    %v480 = vunpack.c.h.b16 %v288
    %v481 = vpack.c.b16 %v357, %v353
    %v482 = vpack.c.b16 %v358, %v354
    %v483 = vpack.c.b16 %v359, %v355
    %v484 = vpack.c.b16 %v360, %v356
    %v485 = vpack.c.b16 %v365, %v361
    %v486 = vpack.c.b16 %v366, %v362
    %v487 = vpack.c.b16 %v367, %v363
    %v488 = vpack.c.b16 %v368, %v364
    %v489 = vpack.c.b16 %v373, %v369
    %v490 = vpack.c.b16 %v374, %v370
    %v491 = vpack.c.b16 %v375, %v371
    %v492 = vpack.c.b16 %v376, %v372
    %v493 = vpack.c.b16 %v381, %v377
    %v494 = vpack.c.b16 %v382, %v378
    %v495 = vpack.c.b16 %v383, %v379
    %v496 = vpack.c.b16 %v384, %v380
    %v497 = vpack.c.b16 %v389, %v385
    %v498 = vpack.c.b16 %v390, %v386
    %v499 = vpack.c.b16 %v391, %v387
    %v500 = vpack.c.b16 %v392, %v388
    %v501 = vpack.c.b16 %v397, %v393
    %v502 = vpack.c.b16 %v398, %v394
    %v503 = vpack.c.b16 %v399, %v395
    %v504 = vpack.c.b16 %v400, %v396
    %v505 = vpack.c.b16 %v405, %v401
    %v506 = vpack.c.b16 %v406, %v402
    %v507 = vpack.c.b16 %v407, %v403
    %v508 = vpack.c.b16 %v408, %v404
    %v509 = vpack.c.b16 %v413, %v409
    %v510 = vpack.c.b16 %v414, %v410
    %v511 = vpack.c.b16 %v415, %v411
    %v512 = vpack.c.b16 %v416, %v412
    %v513 = vpack.c.b16 %v421, %v417
    %v514 = vpack.c.b16 %v422, %v418
    %v515 = vpack.c.b16 %v423, %v419
    %v516 = vpack.c.b16 %v424, %v420
    %v517 = vpack.c.b16 %v429, %v425
    %v518 = vpack.c.b16 %v430, %v426
    %v519 = vpack.c.b16 %v431, %v427
    %v520 = vpack.c.b16 %v432, %v428
    %v521 = vpack.c.b16 %v437, %v433
    %v522 = vpack.c.b16 %v438, %v434
    %v523 = vpack.c.b16 %v439, %v435
    %v524 = vpack.c.b16 %v440, %v436
    %v525 = vpack.c.b16 %v445, %v441
    %v526 = vpack.c.b16 %v446, %v442
    %v527 = vpack.c.b16 %v447, %v443
    %v528 = vpack.c.b16 %v448, %v444
    %v529 = vpack.c.b16 %v453, %v449
    %v530 = vpack.c.b16 %v454, %v450
    %v531 = vpack.c.b16 %v455, %v451
    %v532 = vpack.c.b16 %v456, %v452
    %v533 = vpack.c.b16 %v461, %v457
    %v534 = vpack.c.b16 %v462, %v458
    %v535 = vpack.c.b16 %v463, %v459
    %v536 = vpack.c.b16 %v464, %v460
    %v537 = vpack.c.b16 %v469, %v465
    %v538 = vpack.c.b16 %v470, %v466
    %v539 = vpack.c.b16 %v471, %v467
    %v540 = vpack.c.b16 %v472, %v468
    %v541 = vpack.c.b16 %v477, %v473
    %v542 = vpack.c.b16 %v478, %v474
    %v543 = vpack.c.b16 %v479, %v475
    %v544 = vpack.c.b16 %v480, %v476
    %609 = vmatprep.subr.bf16.mxu0 %v482
    %610 = vmatpush1.bf16.msra.mxu0 %v481
    %611 = vmatprep.subr.bf16.mxu0 %v486
    %612 = vmatpush1.bf16.msra.mxu0 %v485
    %613 = vmatprep.subr.bf16.mxu0 %v490
    %614 = vmatpush1.bf16.msra.mxu0 %v489
    %615 = vmatprep.subr.bf16.mxu0 %v494
    %616 = vmatpush1.bf16.msra.mxu0 %v493
    %617 = vmatprep.subr.bf16.mxu0 %v498
    %618 = vmatpush1.bf16.msra.mxu0 %v497
    %619 = vmatprep.subr.bf16.mxu0 %v502
    %620 = vmatpush1.bf16.msra.mxu0 %v501
    %621 = vmatprep.subr.bf16.mxu0 %v506
    %622 = vmatpush1.bf16.msra.mxu0 %v505
    %623 = vmatprep.subr.bf16.mxu0 %v510
    %624 = vmatpush1.bf16.msra.mxu0 %v509
    %625 = vmatprep.subr.bf16.mxu0 %v514
    %626 = vmatpush1.bf16.msra.mxu0 %v513
    %627 = vmatprep.subr.bf16.mxu0 %v518
    %628 = vmatpush1.bf16.msra.mxu0 %v517
    %629 = vmatprep.subr.bf16.mxu0 %v522
    %630 = vmatpush1.bf16.msra.mxu0 %v521
    %631 = vmatprep.subr.bf16.mxu0 %v526
    %632 = vmatpush1.bf16.msra.mxu0 %v525
    %633 = vmatprep.subr.bf16.mxu0 %v530
    %634 = vmatpush1.bf16.msra.mxu0 %v529
    %635 = vmatprep.subr.bf16.mxu0 %v534
    %636 = vmatpush1.bf16.msra.mxu0 %v533
    %637 = vmatprep.subr.bf16.mxu0 %v538
    %638 = vmatpush1.bf16.msra.mxu0 %v537
    %639 = vmatprep.subr.bf16.mxu0 %v542
    %640 = vmatpush1.bf16.msra.mxu0 %v541
    %641 = vmatprep.mubr.bf16.mxu0 %v224
    %642 = vmatmul.mubr.bf16.gmra.mrb[0].mxu0 %v223
    %v643 = vpop.f32.mrb[0].mxu0
    %v644 = vadd.f32 0.0, %v643
    %v645 = vpop.f32.mrb[0].mxu0
    %v646 = vadd.f32 0.0, %v645
    %v647 = vpop.f32.mrb[0].mxu0
    %v648 = vadd.f32 0.0, %v647
    %v649 = vpop.f32.mrb[0].mxu0
    %v650 = vadd.f32 0.0, %v649
    %651 = vdwg.mxu0
    %652 = vmatprep.subr.bf16.mxu0 %v484
    %653 = vmatpush1.bf16.msra.mxu0 %v483
    %654 = vmatprep.subr.bf16.mxu0 %v488
    %655 = vmatpush1.bf16.msra.mxu0 %v487
    %656 = vmatprep.subr.bf16.mxu0 %v492
    %657 = vmatpush1.bf16.msra.mxu0 %v491
    %658 = vmatprep.subr.bf16.mxu0 %v496
    %659 = vmatpush1.bf16.msra.mxu0 %v495
    %660 = vmatprep.subr.bf16.mxu0 %v500
    %661 = vmatpush1.bf16.msra.mxu0 %v499
    %662 = vmatprep.subr.bf16.mxu0 %v504
    %663 = vmatpush1.bf16.msra.mxu0 %v503
    %664 = vmatprep.subr.bf16.mxu0 %v508
    %665 = vmatpush1.bf16.msra.mxu0 %v507
    %666 = vmatprep.subr.bf16.mxu0 %v512
    %667 = vmatpush1.bf16.msra.mxu0 %v511
    %668 = vmatprep.subr.bf16.mxu0 %v516
    %669 = vmatpush1.bf16.msra.mxu0 %v515
    %670 = vmatprep.subr.bf16.mxu0 %v520
    %671 = vmatpush1.bf16.msra.mxu0 %v519
    %672 = vmatprep.subr.bf16.mxu0 %v524
    %673 = vmatpush1.bf16.msra.mxu0 %v523
    %674 = vmatprep.subr.bf16.mxu0 %v528
    %675 = vmatpush1.bf16.msra.mxu0 %v527
    %676 = vmatprep.subr.bf16.mxu0 %v532
    %677 = vmatpush1.bf16.msra.mxu0 %v531
    %678 = vmatprep.subr.bf16.mxu0 %v536
    %679 = vmatpush1.bf16.msra.mxu0 %v535
    %680 = vmatprep.subr.bf16.mxu0 %v540
    %681 = vmatpush1.bf16.msra.mxu0 %v539
    %682 = vmatprep.subr.bf16.mxu0 %v544
    %683 = vmatpush1.bf16.msra.mxu0 %v543
    %684 = vmatprep.mubr.bf16.mxu0 %v224
    %685 = vmatmul.mubr.bf16.gmra.mrb[0].mxu0 %v223
    %v686 = vpop.f32.mrb[0].mxu0
    %v687 = vadd.f32 0.0, %v686
    %v688 = vpop.f32.mrb[0].mxu0
    %v689 = vadd.f32 0.0, %v688
    %v690 = vpop.f32.mrb[0].mxu0
    %v691 = vadd.f32 0.0, %v690
    %v692 = vpop.f32.mrb[0].mxu0
    %v693 = vadd.f32 0.0, %v692
    %694 = vdwg.mxu0
    %v695 = vpack.c.bf16 %v648, %v644
    %v696 = vpack.c.bf16 %v650, %v646
    %v697 = vpack.c.bf16 %v691, %v687
    %v698 = vpack.c.bf16 %v693, %v689
    %v699 = vld [vmem:[%s4] sm:$0xf]
    %v702 = vunpack.c.l.s4 1966171168
    %v703 = vunpack.c.0.s8 %v702
    %v704 = vlaneseq
    %v705 = vshrl.u32 %v704, 7
    %v706 = vsub.s32 %v703, %v705
    %v707 = vrot.slane %v699, %v706
    %v708 = vcombine.high %v707, %v707
    %v710 = vunpack.c.l.s4 1966171168
    %v711 = vunpack.c.0.s8 %v710
    %v712 = vlaneseq
    %v713 = vshrl.u32 %v712, 7
    %v714 = vsub.s32 %v711, %v713
    %v715 = vrot.slane %v707, %v714
    %v717 = vunpack.c.l.s4 1966171168
    %v718 = vunpack.c.0.s8 %v717
    %v719 = vlaneseq
    %v720 = vshrl.u32 %v719, 7
    %v721 = vsub.s32 %v718, %v720
    %v722 = vrot.slane %v708, %v721
    %v723 = vcombine.high %v715, %v715
    %v724 = vcombine.high %v722, %v722
    %v726 = vpack.i.b16 %v715, %v715
    %v728 = vlaneseq
    %v729 = vshrl.u32 %v728, 7
    %v730 = vsub.s32 0, %v729
    %v731 = vrot.slane %v726, %v730
    %v733 = vpack.i.b16 %v722, %v722
    %v735 = vlaneseq
    %v736 = vshrl.u32 %v735, 7
    %v737 = vsub.s32 0, %v736
    %v738 = vrot.slane %v733, %v737
    %v740 = vpack.i.b16 %v723, %v723
    %v742 = vlaneseq
    %v743 = vshrl.u32 %v742, 7
    %v744 = vsub.s32 0, %v743
    %v745 = vrot.slane %v740, %v744
    %v747 = vpack.i.b16 %v724, %v724
    %v749 = vlaneseq
    %v750 = vshrl.u32 %v749, 7
    %v751 = vsub.s32 0, %v750
    %v752 = vrot.slane %v747, %v751
    %v753 = vadd.bf16 %v695, %v731
    %v754 = vadd.bf16 %v696, %v738
    %v755 = vadd.bf16 %v697, %v745
    %v756 = vadd.bf16 %v698, %v752
    %vm757 = vcmp.gt.bf16.partialorder %v753, 0
    %vm758 = vcmp.gt.bf16.partialorder %v754, 0
    %vm759 = vcmp.gt.bf16.partialorder %v755, 0
    %vm760 = vcmp.gt.bf16.partialorder %v756, 0
    %v761 = vmul.bf16 %v753, 1045249613
    %v762 = vmul.bf16 %v754, 1045249613
    %v763 = vmul.bf16 %v755, 1045249613
    %v764 = vmul.bf16 %v756, 1045249613
    %v765 = vsel %vm757, %v753, %v761
    %v766 = vsel %vm758, %v754, %v762
    %v767 = vsel %vm759, %v755, %v763
    %v768 = vsel %vm760, %v756, %v764
    %v769 = vld [vmem:[%s5] sm:$0xff]
    %v770 = vld [vmem:[%s5 + $0x8] sm:$0xff]
    %v771 = vld [vmem:[%s5 + $0x10] sm:$0xff]
    %v772 = vld [vmem:[%s5 + $0x18] sm:$0xff]
    %v773 = vld [vmem:[%s5 + $0x20] sm:$0xff]
    %v774 = vld [vmem:[%s5 + $0x28] sm:$0xff]
    %v775 = vld [vmem:[%s5 + $0x30] sm:$0xff]
    %v776 = vld [vmem:[%s5 + $0x38] sm:$0xff]
    %v777 = vld [vmem:[%s5 + $0x40] sm:$0xff]
    %v778 = vld [vmem:[%s5 + $0x48] sm:$0xff]
    %v779 = vld [vmem:[%s5 + $0x50] sm:$0xff]
    %v780 = vld [vmem:[%s5 + $0x58] sm:$0xff]
    %v781 = vld [vmem:[%s5 + $0x60] sm:$0xff]
    %v782 = vld [vmem:[%s5 + $0x68] sm:$0xff]
    %v783 = vld [vmem:[%s5 + $0x70] sm:$0xff]
    %v784 = vld [vmem:[%s5 + $0x78] sm:$0xff]
    %v785 = vld [vmem:[%s5 + $0x80] sm:$0xff]
    %v786 = vld [vmem:[%s5 + $0x88] sm:$0xff]
    %v787 = vld [vmem:[%s5 + $0x90] sm:$0xff]
    %v788 = vld [vmem:[%s5 + $0x98] sm:$0xff]
    %v789 = vld [vmem:[%s5 + $0xa0] sm:$0xff]
    %v790 = vld [vmem:[%s5 + $0xa8] sm:$0xff]
    %v791 = vld [vmem:[%s5 + $0xb0] sm:$0xff]
    %v792 = vld [vmem:[%s5 + $0xb8] sm:$0xff]
    %v793 = vld [vmem:[%s5 + $0xc0] sm:$0xff]
    %v794 = vld [vmem:[%s5 + $0xc8] sm:$0xff]
    %v795 = vld [vmem:[%s5 + $0xd0] sm:$0xff]
    %v796 = vld [vmem:[%s5 + $0xd8] sm:$0xff]
    %v797 = vld [vmem:[%s5 + $0xe0] sm:$0xff]
    %v798 = vld [vmem:[%s5 + $0xe8] sm:$0xff]
    %v799 = vld [vmem:[%s5 + $0xf0] sm:$0xff]
    %v800 = vld [vmem:[%s5 + $0xf8] sm:$0xff]
    %v801 = vld [vmem:[%s5 + $0x100] sm:$0xff]
    %v802 = vld [vmem:[%s5 + $0x108] sm:$0xff]
    %v803 = vld [vmem:[%s5 + $0x110] sm:$0xff]
    %v804 = vld [vmem:[%s5 + $0x118] sm:$0xff]
    %v805 = vld [vmem:[%s5 + $0x120] sm:$0xff]
    %v806 = vld [vmem:[%s5 + $0x128] sm:$0xff]
    %v807 = vld [vmem:[%s5 + $0x130] sm:$0xff]
    %v808 = vld [vmem:[%s5 + $0x138] sm:$0xff]
    %v809 = vld [vmem:[%s5 + $0x140] sm:$0xff]
    %v810 = vld [vmem:[%s5 + $0x148] sm:$0xff]
    %v811 = vld [vmem:[%s5 + $0x150] sm:$0xff]
    %v812 = vld [vmem:[%s5 + $0x158] sm:$0xff]
    %v813 = vld [vmem:[%s5 + $0x160] sm:$0xff]
    %v814 = vld [vmem:[%s5 + $0x168] sm:$0xff]
    %v815 = vld [vmem:[%s5 + $0x170] sm:$0xff]
    %v816 = vld [vmem:[%s5 + $0x178] sm:$0xff]
    %v817 = vld [vmem:[%s5 + $0x180] sm:$0xff]
    %v818 = vld [vmem:[%s5 + $0x188] sm:$0xff]
    %v819 = vld [vmem:[%s5 + $0x190] sm:$0xff]
    %v820 = vld [vmem:[%s5 + $0x198] sm:$0xff]
    %v821 = vld [vmem:[%s5 + $0x1a0] sm:$0xff]
    %v822 = vld [vmem:[%s5 + $0x1a8] sm:$0xff]
    %v823 = vld [vmem:[%s5 + $0x1b0] sm:$0xff]
    %v824 = vld [vmem:[%s5 + $0x1b8] sm:$0xff]
    %v825 = vld [vmem:[%s5 + $0x1c0] sm:$0xff]
    %v826 = vld [vmem:[%s5 + $0x1c8] sm:$0xff]
    %v827 = vld [vmem:[%s5 + $0x1d0] sm:$0xff]
    %v828 = vld [vmem:[%s5 + $0x1d8] sm:$0xff]
    %v829 = vld [vmem:[%s5 + $0x1e0] sm:$0xff]
    %v830 = vld [vmem:[%s5 + $0x1e8] sm:$0xff]
    %v831 = vld [vmem:[%s5 + $0x1f0] sm:$0xff]
    %v832 = vld [vmem:[%s5 + $0x1f8] sm:$0xff]
    %v833 = vld [vmem:[%s5 + $0x200] sm:$0xff]
    %v834 = vld [vmem:[%s5 + $0x208] sm:$0xff]
    %v835 = vld [vmem:[%s5 + $0x210] sm:$0xff]
    %v836 = vld [vmem:[%s5 + $0x218] sm:$0xff]
    %v837 = vld [vmem:[%s5 + $0x220] sm:$0xff]
    %v838 = vld [vmem:[%s5 + $0x228] sm:$0xff]
    %v839 = vld [vmem:[%s5 + $0x230] sm:$0xff]
    %v840 = vld [vmem:[%s5 + $0x238] sm:$0xff]
    %v841 = vld [vmem:[%s5 + $0x240] sm:$0xff]
    %v842 = vld [vmem:[%s5 + $0x248] sm:$0xff]
    %v843 = vld [vmem:[%s5 + $0x250] sm:$0xff]
    %v844 = vld [vmem:[%s5 + $0x258] sm:$0xff]
    %v845 = vld [vmem:[%s5 + $0x260] sm:$0xff]
    %v846 = vld [vmem:[%s5 + $0x268] sm:$0xff]
    %v847 = vld [vmem:[%s5 + $0x270] sm:$0xff]
    %v848 = vld [vmem:[%s5 + $0x278] sm:$0xff]
    %v849 = vld [vmem:[%s5 + $0x280] sm:$0xff]
    %v850 = vld [vmem:[%s5 + $0x288] sm:$0xff]
    %v851 = vld [vmem:[%s5 + $0x290] sm:$0xff]
    %v852 = vld [vmem:[%s5 + $0x298] sm:$0xff]
    %v853 = vld [vmem:[%s5 + $0x2a0] sm:$0xff]
    %v854 = vld [vmem:[%s5 + $0x2a8] sm:$0xff]
    %v855 = vld [vmem:[%s5 + $0x2b0] sm:$0xff]
    %v856 = vld [vmem:[%s5 + $0x2b8] sm:$0xff]
    %v857 = vld [vmem:[%s5 + $0x2c0] sm:$0xff]
    %v858 = vld [vmem:[%s5 + $0x2c8] sm:$0xff]
    %v859 = vld [vmem:[%s5 + $0x2d0] sm:$0xff]
    %v860 = vld [vmem:[%s5 + $0x2d8] sm:$0xff]
    %v861 = vld [vmem:[%s5 + $0x2e0] sm:$0xff]
    %v862 = vld [vmem:[%s5 + $0x2e8] sm:$0xff]
    %v863 = vld [vmem:[%s5 + $0x2f0] sm:$0xff]
    %v864 = vld [vmem:[%s5 + $0x2f8] sm:$0xff]
    %v865 = vld [vmem:[%s5 + $0x300] sm:$0xff]
    %v866 = vld [vmem:[%s5 + $0x308] sm:$0xff]
    %v867 = vld [vmem:[%s5 + $0x310] sm:$0xff]
    %v868 = vld [vmem:[%s5 + $0x318] sm:$0xff]
    %v869 = vld [vmem:[%s5 + $0x320] sm:$0xff]
    %v870 = vld [vmem:[%s5 + $0x328] sm:$0xff]
    %v871 = vld [vmem:[%s5 + $0x330] sm:$0xff]
    %v872 = vld [vmem:[%s5 + $0x338] sm:$0xff]
    %v873 = vld [vmem:[%s5 + $0x340] sm:$0xff]
    %v874 = vld [vmem:[%s5 + $0x348] sm:$0xff]
    %v875 = vld [vmem:[%s5 + $0x350] sm:$0xff]
    %v876 = vld [vmem:[%s5 + $0x358] sm:$0xff]
    %v877 = vld [vmem:[%s5 + $0x360] sm:$0xff]
    %v878 = vld [vmem:[%s5 + $0x368] sm:$0xff]
    %v879 = vld [vmem:[%s5 + $0x370] sm:$0xff]
    %v880 = vld [vmem:[%s5 + $0x378] sm:$0xff]
    %v881 = vld [vmem:[%s5 + $0x380] sm:$0xff]
    %v882 = vld [vmem:[%s5 + $0x388] sm:$0xff]
    %v883 = vld [vmem:[%s5 + $0x390] sm:$0xff]
    %v884 = vld [vmem:[%s5 + $0x398] sm:$0xff]
    %v885 = vld [vmem:[%s5 + $0x3a0] sm:$0xff]
    %v886 = vld [vmem:[%s5 + $0x3a8] sm:$0xff]
    %v887 = vld [vmem:[%s5 + $0x3b0] sm:$0xff]
    %v888 = vld [vmem:[%s5 + $0x3b8] sm:$0xff]
    %v889 = vld [vmem:[%s5 + $0x3c0] sm:$0xff]
    %v890 = vld [vmem:[%s5 + $0x3c8] sm:$0xff]
    %v891 = vld [vmem:[%s5 + $0x3d0] sm:$0xff]
    %v892 = vld [vmem:[%s5 + $0x3d8] sm:$0xff]
    %v893 = vld [vmem:[%s5 + $0x3e0] sm:$0xff]
    %v894 = vld [vmem:[%s5 + $0x3e8] sm:$0xff]
    %v895 = vld [vmem:[%s5 + $0x3f0] sm:$0xff]
    %v896 = vld [vmem:[%s5 + $0x3f8] sm:$0xff]
    %v897 = vld [vmem:[%s5 + $0x400] sm:$0xff]
    %v898 = vld [vmem:[%s5 + $0x408] sm:$0xff]
    %v899 = vld [vmem:[%s5 + $0x410] sm:$0xff]
    %v900 = vld [vmem:[%s5 + $0x418] sm:$0xff]
    %v901 = vld [vmem:[%s5 + $0x420] sm:$0xff]
    %v902 = vld [vmem:[%s5 + $0x428] sm:$0xff]
    %v903 = vld [vmem:[%s5 + $0x430] sm:$0xff]
    %v904 = vld [vmem:[%s5 + $0x438] sm:$0xff]
    %v905 = vld [vmem:[%s5 + $0x440] sm:$0xff]
    %v906 = vld [vmem:[%s5 + $0x448] sm:$0xff]
    %v907 = vld [vmem:[%s5 + $0x450] sm:$0xff]
    %v908 = vld [vmem:[%s5 + $0x458] sm:$0xff]
    %v909 = vld [vmem:[%s5 + $0x460] sm:$0xff]
    %v910 = vld [vmem:[%s5 + $0x468] sm:$0xff]
    %v911 = vld [vmem:[%s5 + $0x470] sm:$0xff]
    %v912 = vld [vmem:[%s5 + $0x478] sm:$0xff]
    %v913 = vld [vmem:[%s5 + $0x480] sm:$0xff]
    %v914 = vld [vmem:[%s5 + $0x488] sm:$0xff]
    %v915 = vld [vmem:[%s5 + $0x490] sm:$0xff]
    %v916 = vld [vmem:[%s5 + $0x498] sm:$0xff]
    %v917 = vld [vmem:[%s5 + $0x4a0] sm:$0xff]
    %v918 = vld [vmem:[%s5 + $0x4a8] sm:$0xff]
    %v919 = vld [vmem:[%s5 + $0x4b0] sm:$0xff]
    %v920 = vld [vmem:[%s5 + $0x4b8] sm:$0xff]
    %v921 = vld [vmem:[%s5 + $0x4c0] sm:$0xff]
    %v922 = vld [vmem:[%s5 + $0x4c8] sm:$0xff]
    %v923 = vld [vmem:[%s5 + $0x4d0] sm:$0xff]
    %v924 = vld [vmem:[%s5 + $0x4d8] sm:$0xff]
    %v925 = vld [vmem:[%s5 + $0x4e0] sm:$0xff]
    %v926 = vld [vmem:[%s5 + $0x4e8] sm:$0xff]
    %v927 = vld [vmem:[%s5 + $0x4f0] sm:$0xff]
    %v928 = vld [vmem:[%s5 + $0x4f8] sm:$0xff]
    %v929 = vld [vmem:[%s5 + $0x500] sm:$0xff]
    %v930 = vld [vmem:[%s5 + $0x508] sm:$0xff]
    %v931 = vld [vmem:[%s5 + $0x510] sm:$0xff]
    %v932 = vld [vmem:[%s5 + $0x518] sm:$0xff]
    %v933 = vld [vmem:[%s5 + $0x520] sm:$0xff]
    %v934 = vld [vmem:[%s5 + $0x528] sm:$0xff]
    %v935 = vld [vmem:[%s5 + $0x530] sm:$0xff]
    %v936 = vld [vmem:[%s5 + $0x538] sm:$0xff]
    %v937 = vld [vmem:[%s5 + $0x540] sm:$0xff]
    %v938 = vld [vmem:[%s5 + $0x548] sm:$0xff]
    %v939 = vld [vmem:[%s5 + $0x550] sm:$0xff]
    %v940 = vld [vmem:[%s5 + $0x558] sm:$0xff]
    %v941 = vld [vmem:[%s5 + $0x560] sm:$0xff]
    %v942 = vld [vmem:[%s5 + $0x568] sm:$0xff]
    %v943 = vld [vmem:[%s5 + $0x570] sm:$0xff]
    %v944 = vld [vmem:[%s5 + $0x578] sm:$0xff]
    %v945 = vld [vmem:[%s5 + $0x580] sm:$0xff]
    %v946 = vld [vmem:[%s5 + $0x588] sm:$0xff]
    %v947 = vld [vmem:[%s5 + $0x590] sm:$0xff]
    %v948 = vld [vmem:[%s5 + $0x598] sm:$0xff]
    %v949 = vld [vmem:[%s5 + $0x5a0] sm:$0xff]
    %v950 = vld [vmem:[%s5 + $0x5a8] sm:$0xff]
    %v951 = vld [vmem:[%s5 + $0x5b0] sm:$0xff]
    %v952 = vld [vmem:[%s5 + $0x5b8] sm:$0xff]
    %v953 = vld [vmem:[%s5 + $0x5c0] sm:$0xff]
    %v954 = vld [vmem:[%s5 + $0x5c8] sm:$0xff]
    %v955 = vld [vmem:[%s5 + $0x5d0] sm:$0xff]
    %v956 = vld [vmem:[%s5 + $0x5d8] sm:$0xff]
    %v957 = vld [vmem:[%s5 + $0x5e0] sm:$0xff]
    %v958 = vld [vmem:[%s5 + $0x5e8] sm:$0xff]
    %v959 = vld [vmem:[%s5 + $0x5f0] sm:$0xff]
    %v960 = vld [vmem:[%s5 + $0x5f8] sm:$0xff]
    %v961 = vld [vmem:[%s5 + $0x600] sm:$0xff]
    %v962 = vld [vmem:[%s5 + $0x608] sm:$0xff]
    %v963 = vld [vmem:[%s5 + $0x610] sm:$0xff]
    %v964 = vld [vmem:[%s5 + $0x618] sm:$0xff]
    %v965 = vld [vmem:[%s5 + $0x620] sm:$0xff]
    %v966 = vld [vmem:[%s5 + $0x628] sm:$0xff]
    %v967 = vld [vmem:[%s5 + $0x630] sm:$0xff]
    %v968 = vld [vmem:[%s5 + $0x638] sm:$0xff]
    %v969 = vld [vmem:[%s5 + $0x640] sm:$0xff]
    %v970 = vld [vmem:[%s5 + $0x648] sm:$0xff]
    %v971 = vld [vmem:[%s5 + $0x650] sm:$0xff]
    %v972 = vld [vmem:[%s5 + $0x658] sm:$0xff]
    %v973 = vld [vmem:[%s5 + $0x660] sm:$0xff]
    %v974 = vld [vmem:[%s5 + $0x668] sm:$0xff]
    %v975 = vld [vmem:[%s5 + $0x670] sm:$0xff]
    %v976 = vld [vmem:[%s5 + $0x678] sm:$0xff]
    %v977 = vld [vmem:[%s5 + $0x680] sm:$0xff]
    %v978 = vld [vmem:[%s5 + $0x688] sm:$0xff]
    %v979 = vld [vmem:[%s5 + $0x690] sm:$0xff]
    %v980 = vld [vmem:[%s5 + $0x698] sm:$0xff]
    %v981 = vld [vmem:[%s5 + $0x6a0] sm:$0xff]
    %v982 = vld [vmem:[%s5 + $0x6a8] sm:$0xff]
    %v983 = vld [vmem:[%s5 + $0x6b0] sm:$0xff]
    %v984 = vld [vmem:[%s5 + $0x6b8] sm:$0xff]
    %v985 = vld [vmem:[%s5 + $0x6c0] sm:$0xff]
    %v986 = vld [vmem:[%s5 + $0x6c8] sm:$0xff]
    %v987 = vld [vmem:[%s5 + $0x6d0] sm:$0xff]
    %v988 = vld [vmem:[%s5 + $0x6d8] sm:$0xff]
    %v989 = vld [vmem:[%s5 + $0x6e0] sm:$0xff]
    %v990 = vld [vmem:[%s5 + $0x6e8] sm:$0xff]
    %v991 = vld [vmem:[%s5 + $0x6f0] sm:$0xff]
    %v992 = vld [vmem:[%s5 + $0x6f8] sm:$0xff]
    %v993 = vld [vmem:[%s5 + $0x700] sm:$0xff]
    %v994 = vld [vmem:[%s5 + $0x708] sm:$0xff]
    %v995 = vld [vmem:[%s5 + $0x710] sm:$0xff]
    %v996 = vld [vmem:[%s5 + $0x718] sm:$0xff]
    %v997 = vld [vmem:[%s5 + $0x720] sm:$0xff]
    %v998 = vld [vmem:[%s5 + $0x728] sm:$0xff]
    %v999 = vld [vmem:[%s5 + $0x730] sm:$0xff]
    %v1000 = vld [vmem:[%s5 + $0x738] sm:$0xff]
    %v1001 = vld [vmem:[%s5 + $0x740] sm:$0xff]
    %v1002 = vld [vmem:[%s5 + $0x748] sm:$0xff]
    %v1003 = vld [vmem:[%s5 + $0x750] sm:$0xff]
    %v1004 = vld [vmem:[%s5 + $0x758] sm:$0xff]
    %v1005 = vld [vmem:[%s5 + $0x760] sm:$0xff]
    %v1006 = vld [vmem:[%s5 + $0x768] sm:$0xff]
    %v1007 = vld [vmem:[%s5 + $0x770] sm:$0xff]
    %v1008 = vld [vmem:[%s5 + $0x778] sm:$0xff]
    %v1009 = vld [vmem:[%s5 + $0x780] sm:$0xff]
    %v1010 = vld [vmem:[%s5 + $0x788] sm:$0xff]
    %v1011 = vld [vmem:[%s5 + $0x790] sm:$0xff]
    %v1012 = vld [vmem:[%s5 + $0x798] sm:$0xff]
    %v1013 = vld [vmem:[%s5 + $0x7a0] sm:$0xff]
    %v1014 = vld [vmem:[%s5 + $0x7a8] sm:$0xff]
    %v1015 = vld [vmem:[%s5 + $0x7b0] sm:$0xff]
    %v1016 = vld [vmem:[%s5 + $0x7b8] sm:$0xff]
    %v1017 = vld [vmem:[%s5 + $0x7c0] sm:$0xff]
    %v1018 = vld [vmem:[%s5 + $0x7c8] sm:$0xff]
    %v1019 = vld [vmem:[%s5 + $0x7d0] sm:$0xff]
    %v1020 = vld [vmem:[%s5 + $0x7d8] sm:$0xff]
    %v1021 = vld [vmem:[%s5 + $0x7e0] sm:$0xff]
    %v1022 = vld [vmem:[%s5 + $0x7e8] sm:$0xff]
    %v1023 = vld [vmem:[%s5 + $0x7f0] sm:$0xff]
    %v1024 = vld [vmem:[%s5 + $0x7f8] sm:$0xff]
    %v1281 = vunpack.c.l.b16 %v769
    %v1282 = vunpack.c.h.b16 %v769
    %v1283 = vunpack.c.l.b16 %v770
    %v1284 = vunpack.c.h.b16 %v770
    %v1285 = vunpack.c.l.b16 %v771
    %v1286 = vunpack.c.h.b16 %v771
    %v1287 = vunpack.c.l.b16 %v772
    %v1288 = vunpack.c.h.b16 %v772
    %v1289 = vunpack.c.l.b16 %v773
    %v1290 = vunpack.c.h.b16 %v773
    %v1291 = vunpack.c.l.b16 %v774
    %v1292 = vunpack.c.h.b16 %v774
    %v1293 = vunpack.c.l.b16 %v775
    %v1294 = vunpack.c.h.b16 %v775
    %v1295 = vunpack.c.l.b16 %v776
    %v1296 = vunpack.c.h.b16 %v776
    %v1297 = vunpack.c.l.b16 %v777
    %v1298 = vunpack.c.h.b16 %v777
    %v1299 = vunpack.c.l.b16 %v778
    %v1300 = vunpack.c.h.b16 %v778
    %v1301 = vunpack.c.l.b16 %v779
    %v1302 = vunpack.c.h.b16 %v779
    %v1303 = vunpack.c.l.b16 %v780
    %v1304 = vunpack.c.h.b16 %v780
    %v1305 = vunpack.c.l.b16 %v781
    %v1306 = vunpack.c.h.b16 %v781
    %v1307 = vunpack.c.l.b16 %v782
    %v1308 = vunpack.c.h.b16 %v782
    %v1309 = vunpack.c.l.b16 %v783
    %v1310 = vunpack.c.h.b16 %v783
    %v1311 = vunpack.c.l.b16 %v784
    %v1312 = vunpack.c.h.b16 %v784
    %v1313 = vunpack.c.l.b16 %v785
    %v1314 = vunpack.c.h.b16 %v785
    %v1315 = vunpack.c.l.b16 %v786
    %v1316 = vunpack.c.h.b16 %v786
    %v1317 = vunpack.c.l.b16 %v787
    %v1318 = vunpack.c.h.b16 %v787
    %v1319 = vunpack.c.l.b16 %v788
    %v1320 = vunpack.c.h.b16 %v788
    %v1321 = vunpack.c.l.b16 %v789
    %v1322 = vunpack.c.h.b16 %v789
    %v1323 = vunpack.c.l.b16 %v790
    %v1324 = vunpack.c.h.b16 %v790
    %v1325 = vunpack.c.l.b16 %v791
    %v1326 = vunpack.c.h.b16 %v791
    %v1327 = vunpack.c.l.b16 %v792
    %v1328 = vunpack.c.h.b16 %v792
    %v1329 = vunpack.c.l.b16 %v793
    %v1330 = vunpack.c.h.b16 %v793
    %v1331 = vunpack.c.l.b16 %v794
    %v1332 = vunpack.c.h.b16 %v794
    %v1333 = vunpack.c.l.b16 %v795
    %v1334 = vunpack.c.h.b16 %v795
    %v1335 = vunpack.c.l.b16 %v796
    %v1336 = vunpack.c.h.b16 %v796
    %v1337 = vunpack.c.l.b16 %v797
    %v1338 = vunpack.c.h.b16 %v797
    %v1339 = vunpack.c.l.b16 %v798
    %v1340 = vunpack.c.h.b16 %v798
    %v1341 = vunpack.c.l.b16 %v799
    %v1342 = vunpack.c.h.b16 %v799
    %v1343 = vunpack.c.l.b16 %v800
    %v1344 = vunpack.c.h.b16 %v800
    %v1345 = vunpack.c.l.b16 %v801
    %v1346 = vunpack.c.h.b16 %v801
    %v1347 = vunpack.c.l.b16 %v802
    %v1348 = vunpack.c.h.b16 %v802
    %v1349 = vunpack.c.l.b16 %v803
    %v1350 = vunpack.c.h.b16 %v803
    %v1351 = vunpack.c.l.b16 %v804
    %v1352 = vunpack.c.h.b16 %v804
    %v1353 = vunpack.c.l.b16 %v805
    %v1354 = vunpack.c.h.b16 %v805
    %v1355 = vunpack.c.l.b16 %v806
    %v1356 = vunpack.c.h.b16 %v806
    %v1357 = vunpack.c.l.b16 %v807
    %v1358 = vunpack.c.h.b16 %v807
    %v1359 = vunpack.c.l.b16 %v808
    %v1360 = vunpack.c.h.b16 %v808
    %v1361 = vunpack.c.l.b16 %v809
    %v1362 = vunpack.c.h.b16 %v809
    %v1363 = vunpack.c.l.b16 %v810
    %v1364 = vunpack.c.h.b16 %v810
    %v1365 = vunpack.c.l.b16 %v811
    %v1366 = vunpack.c.h.b16 %v811
    %v1367 = vunpack.c.l.b16 %v812
    %v1368 = vunpack.c.h.b16 %v812
    %v1369 = vunpack.c.l.b16 %v813
    %v1370 = vunpack.c.h.b16 %v813
    %v1371 = vunpack.c.l.b16 %v814
    %v1372 = vunpack.c.h.b16 %v814
    %v1373 = vunpack.c.l.b16 %v815
    %v1374 = vunpack.c.h.b16 %v815
    %v1375 = vunpack.c.l.b16 %v816
    %v1376 = vunpack.c.h.b16 %v816
    %v1377 = vunpack.c.l.b16 %v817
    %v1378 = vunpack.c.h.b16 %v817
    %v1379 = vunpack.c.l.b16 %v818
    %v1380 = vunpack.c.h.b16 %v818
    %v1381 = vunpack.c.l.b16 %v819
    %v1382 = vunpack.c.h.b16 %v819
    %v1383 = vunpack.c.l.b16 %v820
    %v1384 = vunpack.c.h.b16 %v820
    %v1385 = vunpack.c.l.b16 %v821
    %v1386 = vunpack.c.h.b16 %v821
    %v1387 = vunpack.c.l.b16 %v822
    %v1388 = vunpack.c.h.b16 %v822
    %v1389 = vunpack.c.l.b16 %v823
    %v1390 = vunpack.c.h.b16 %v823
    %v1391 = vunpack.c.l.b16 %v824
    %v1392 = vunpack.c.h.b16 %v824
    %v1393 = vunpack.c.l.b16 %v825
    %v1394 = vunpack.c.h.b16 %v825
    %v1395 = vunpack.c.l.b16 %v826
    %v1396 = vunpack.c.h.b16 %v826
    %v1397 = vunpack.c.l.b16 %v827
    %v1398 = vunpack.c.h.b16 %v827
    %v1399 = vunpack.c.l.b16 %v828
    %v1400 = vunpack.c.h.b16 %v828
    %v1401 = vunpack.c.l.b16 %v829
    %v1402 = vunpack.c.h.b16 %v829
    %v1403 = vunpack.c.l.b16 %v830
    %v1404 = vunpack.c.h.b16 %v830
    %v1405 = vunpack.c.l.b16 %v831
    %v1406 = vunpack.c.h.b16 %v831
    %v1407 = vunpack.c.l.b16 %v832
    %v1408 = vunpack.c.h.b16 %v832
    %v1409 = vunpack.c.l.b16 %v833
    %v1410 = vunpack.c.h.b16 %v833
    %v1411 = vunpack.c.l.b16 %v834
    %v1412 = vunpack.c.h.b16 %v834
    %v1413 = vunpack.c.l.b16 %v835
    %v1414 = vunpack.c.h.b16 %v835
    %v1415 = vunpack.c.l.b16 %v836
    %v1416 = vunpack.c.h.b16 %v836
    %v1417 = vunpack.c.l.b16 %v837
    %v1418 = vunpack.c.h.b16 %v837
    %v1419 = vunpack.c.l.b16 %v838
    %v1420 = vunpack.c.h.b16 %v838
    %v1421 = vunpack.c.l.b16 %v839
    %v1422 = vunpack.c.h.b16 %v839
    %v1423 = vunpack.c.l.b16 %v840
    %v1424 = vunpack.c.h.b16 %v840
    %v1425 = vunpack.c.l.b16 %v841
    %v1426 = vunpack.c.h.b16 %v841
    %v1427 = vunpack.c.l.b16 %v842
    %v1428 = vunpack.c.h.b16 %v842
    %v1429 = vunpack.c.l.b16 %v843
    %v1430 = vunpack.c.h.b16 %v843
    %v1431 = vunpack.c.l.b16 %v844
    %v1432 = vunpack.c.h.b16 %v844
    %v1433 = vunpack.c.l.b16 %v845
    %v1434 = vunpack.c.h.b16 %v845
    %v1435 = vunpack.c.l.b16 %v846
    %v1436 = vunpack.c.h.b16 %v846
    %v1437 = vunpack.c.l.b16 %v847
    %v1438 = vunpack.c.h.b16 %v847
    %v1439 = vunpack.c.l.b16 %v848
    %v1440 = vunpack.c.h.b16 %v848
    %v1441 = vunpack.c.l.b16 %v849
    %v1442 = vunpack.c.h.b16 %v849
    %v1443 = vunpack.c.l.b16 %v850
    %v1444 = vunpack.c.h.b16 %v850
    %v1445 = vunpack.c.l.b16 %v851
    %v1446 = vunpack.c.h.b16 %v851
    %v1447 = vunpack.c.l.b16 %v852
    %v1448 = vunpack.c.h.b16 %v852
    %v1449 = vunpack.c.l.b16 %v853
    %v1450 = vunpack.c.h.b16 %v853
    %v1451 = vunpack.c.l.b16 %v854
    %v1452 = vunpack.c.h.b16 %v854
    %v1453 = vunpack.c.l.b16 %v855
    %v1454 = vunpack.c.h.b16 %v855
    %v1455 = vunpack.c.l.b16 %v856
    %v1456 = vunpack.c.h.b16 %v856
    %v1457 = vunpack.c.l.b16 %v857
    %v1458 = vunpack.c.h.b16 %v857
    %v1459 = vunpack.c.l.b16 %v858
    %v1460 = vunpack.c.h.b16 %v858
    %v1461 = vunpack.c.l.b16 %v859
    %v1462 = vunpack.c.h.b16 %v859
    %v1463 = vunpack.c.l.b16 %v860
    %v1464 = vunpack.c.h.b16 %v860
    %v1465 = vunpack.c.l.b16 %v861
    %v1466 = vunpack.c.h.b16 %v861
    %v1467 = vunpack.c.l.b16 %v862
    %v1468 = vunpack.c.h.b16 %v862
    %v1469 = vunpack.c.l.b16 %v863
    %v1470 = vunpack.c.h.b16 %v863
    %v1471 = vunpack.c.l.b16 %v864
    %v1472 = vunpack.c.h.b16 %v864
    %v1473 = vunpack.c.l.b16 %v865
    %v1474 = vunpack.c.h.b16 %v865
    %v1475 = vunpack.c.l.b16 %v866
    %v1476 = vunpack.c.h.b16 %v866
    %v1477 = vunpack.c.l.b16 %v867
    %v1478 = vunpack.c.h.b16 %v867
    %v1479 = vunpack.c.l.b16 %v868
    %v1480 = vunpack.c.h.b16 %v868
    %v1481 = vunpack.c.l.b16 %v869
    %v1482 = vunpack.c.h.b16 %v869
    %v1483 = vunpack.c.l.b16 %v870
    %v1484 = vunpack.c.h.b16 %v870
    %v1485 = vunpack.c.l.b16 %v871
    %v1486 = vunpack.c.h.b16 %v871
    %v1487 = vunpack.c.l.b16 %v872
    %v1488 = vunpack.c.h.b16 %v872
    %v1489 = vunpack.c.l.b16 %v873
    %v1490 = vunpack.c.h.b16 %v873
    %v1491 = vunpack.c.l.b16 %v874
    %v1492 = vunpack.c.h.b16 %v874
    %v1493 = vunpack.c.l.b16 %v875
    %v1494 = vunpack.c.h.b16 %v875
    %v1495 = vunpack.c.l.b16 %v876
    %v1496 = vunpack.c.h.b16 %v876
    %v1497 = vunpack.c.l.b16 %v877
    %v1498 = vunpack.c.h.b16 %v877
    %v1499 = vunpack.c.l.b16 %v878
    %v1500 = vunpack.c.h.b16 %v878
    %v1501 = vunpack.c.l.b16 %v879
    %v1502 = vunpack.c.h.b16 %v879
    %v1503 = vunpack.c.l.b16 %v880
    %v1504 = vunpack.c.h.b16 %v880
    %v1505 = vunpack.c.l.b16 %v881
    %v1506 = vunpack.c.h.b16 %v881
    %v1507 = vunpack.c.l.b16 %v882
    %v1508 = vunpack.c.h.b16 %v882
    %v1509 = vunpack.c.l.b16 %v883
    %v1510 = vunpack.c.h.b16 %v883
    %v1511 = vunpack.c.l.b16 %v884
    %v1512 = vunpack.c.h.b16 %v884
    %v1513 = vunpack.c.l.b16 %v885
    %v1514 = vunpack.c.h.b16 %v885
    %v1515 = vunpack.c.l.b16 %v886
    %v1516 = vunpack.c.h.b16 %v886
    %v1517 = vunpack.c.l.b16 %v887
    %v1518 = vunpack.c.h.b16 %v887
    %v1519 = vunpack.c.l.b16 %v888
    %v1520 = vunpack.c.h.b16 %v888
    %v1521 = vunpack.c.l.b16 %v889
    %v1522 = vunpack.c.h.b16 %v889
    %v1523 = vunpack.c.l.b16 %v890
    %v1524 = vunpack.c.h.b16 %v890
    %v1525 = vunpack.c.l.b16 %v891
    %v1526 = vunpack.c.h.b16 %v891
    %v1527 = vunpack.c.l.b16 %v892
    %v1528 = vunpack.c.h.b16 %v892
    %v1529 = vunpack.c.l.b16 %v893
    %v1530 = vunpack.c.h.b16 %v893
    %v1531 = vunpack.c.l.b16 %v894
    %v1532 = vunpack.c.h.b16 %v894
    %v1533 = vunpack.c.l.b16 %v895
    %v1534 = vunpack.c.h.b16 %v895
    %v1535 = vunpack.c.l.b16 %v896
    %v1536 = vunpack.c.h.b16 %v896
    %v1537 = vunpack.c.l.b16 %v897
    %v1538 = vunpack.c.h.b16 %v897
    %v1539 = vunpack.c.l.b16 %v898
    %v1540 = vunpack.c.h.b16 %v898
    %v1541 = vunpack.c.l.b16 %v899
    %v1542 = vunpack.c.h.b16 %v899
    %v1543 = vunpack.c.l.b16 %v900
    %v1544 = vunpack.c.h.b16 %v900
    %v1545 = vunpack.c.l.b16 %v901
    %v1546 = vunpack.c.h.b16 %v901
    %v1547 = vunpack.c.l.b16 %v902
    %v1548 = vunpack.c.h.b16 %v902
    %v1549 = vunpack.c.l.b16 %v903
    %v1550 = vunpack.c.h.b16 %v903
    %v1551 = vunpack.c.l.b16 %v904
    %v1552 = vunpack.c.h.b16 %v904
    %v1553 = vunpack.c.l.b16 %v905
    %v1554 = vunpack.c.h.b16 %v905
    %v1555 = vunpack.c.l.b16 %v906
    %v1556 = vunpack.c.h.b16 %v906
    %v1557 = vunpack.c.l.b16 %v907
    %v1558 = vunpack.c.h.b16 %v907
    %v1559 = vunpack.c.l.b16 %v908
    %v1560 = vunpack.c.h.b16 %v908
    %v1561 = vunpack.c.l.b16 %v909
    %v1562 = vunpack.c.h.b16 %v909
    %v1563 = vunpack.c.l.b16 %v910
    %v1564 = vunpack.c.h.b16 %v910
    %v1565 = vunpack.c.l.b16 %v911
    %v1566 = vunpack.c.h.b16 %v911
    %v1567 = vunpack.c.l.b16 %v912
    %v1568 = vunpack.c.h.b16 %v912
    %v1569 = vunpack.c.l.b16 %v913
    %v1570 = vunpack.c.h.b16 %v913
    %v1571 = vunpack.c.l.b16 %v914
    %v1572 = vunpack.c.h.b16 %v914
    %v1573 = vunpack.c.l.b16 %v915
    %v1574 = vunpack.c.h.b16 %v915
    %v1575 = vunpack.c.l.b16 %v916
    %v1576 = vunpack.c.h.b16 %v916
    %v1577 = vunpack.c.l.b16 %v917
    %v1578 = vunpack.c.h.b16 %v917
    %v1579 = vunpack.c.l.b16 %v918
    %v1580 = vunpack.c.h.b16 %v918
    %v1581 = vunpack.c.l.b16 %v919
    %v1582 = vunpack.c.h.b16 %v919
    %v1583 = vunpack.c.l.b16 %v920
    %v1584 = vunpack.c.h.b16 %v920
    %v1585 = vunpack.c.l.b16 %v921
    %v1586 = vunpack.c.h.b16 %v921
    %v1587 = vunpack.c.l.b16 %v922
    %v1588 = vunpack.c.h.b16 %v922
    %v1589 = vunpack.c.l.b16 %v923
    %v1590 = vunpack.c.h.b16 %v923
    %v1591 = vunpack.c.l.b16 %v924
    %v1592 = vunpack.c.h.b16 %v924
    %v1593 = vunpack.c.l.b16 %v925
    %v1594 = vunpack.c.h.b16 %v925
    %v1595 = vunpack.c.l.b16 %v926
    %v1596 = vunpack.c.h.b16 %v926
    %v1597 = vunpack.c.l.b16 %v927
    %v1598 = vunpack.c.h.b16 %v927
    %v1599 = vunpack.c.l.b16 %v928
    %v1600 = vunpack.c.h.b16 %v928
    %v1601 = vunpack.c.l.b16 %v929
    %v1602 = vunpack.c.h.b16 %v929
    %v1603 = vunpack.c.l.b16 %v930
    %v1604 = vunpack.c.h.b16 %v930
    %v1605 = vunpack.c.l.b16 %v931
    %v1606 = vunpack.c.h.b16 %v931
    %v1607 = vunpack.c.l.b16 %v932
    %v1608 = vunpack.c.h.b16 %v932
    %v1609 = vunpack.c.l.b16 %v933
    %v1610 = vunpack.c.h.b16 %v933
    %v1611 = vunpack.c.l.b16 %v934
    %v1612 = vunpack.c.h.b16 %v934
    %v1613 = vunpack.c.l.b16 %v935
    %v1614 = vunpack.c.h.b16 %v935
    %v1615 = vunpack.c.l.b16 %v936
    %v1616 = vunpack.c.h.b16 %v936
    %v1617 = vunpack.c.l.b16 %v937
    %v1618 = vunpack.c.h.b16 %v937
    %v1619 = vunpack.c.l.b16 %v938
    %v1620 = vunpack.c.h.b16 %v938
    %v1621 = vunpack.c.l.b16 %v939
    %v1622 = vunpack.c.h.b16 %v939
    %v1623 = vunpack.c.l.b16 %v940
    %v1624 = vunpack.c.h.b16 %v940
    %v1625 = vunpack.c.l.b16 %v941
    %v1626 = vunpack.c.h.b16 %v941
    %v1627 = vunpack.c.l.b16 %v942
    %v1628 = vunpack.c.h.b16 %v942
    %v1629 = vunpack.c.l.b16 %v943
    %v1630 = vunpack.c.h.b16 %v943
    %v1631 = vunpack.c.l.b16 %v944
    %v1632 = vunpack.c.h.b16 %v944
    %v1633 = vunpack.c.l.b16 %v945
    %v1634 = vunpack.c.h.b16 %v945
    %v1635 = vunpack.c.l.b16 %v946
    %v1636 = vunpack.c.h.b16 %v946
    %v1637 = vunpack.c.l.b16 %v947
    %v1638 = vunpack.c.h.b16 %v947
    %v1639 = vunpack.c.l.b16 %v948
    %v1640 = vunpack.c.h.b16 %v948
    %v1641 = vunpack.c.l.b16 %v949
    %v1642 = vunpack.c.h.b16 %v949
    %v1643 = vunpack.c.l.b16 %v950
    %v1644 = vunpack.c.h.b16 %v950
    %v1645 = vunpack.c.l.b16 %v951
    %v1646 = vunpack.c.h.b16 %v951
    %v1647 = vunpack.c.l.b16 %v952
    %v1648 = vunpack.c.h.b16 %v952
    %v1649 = vunpack.c.l.b16 %v953
    %v1650 = vunpack.c.h.b16 %v953
    %v1651 = vunpack.c.l.b16 %v954
    %v1652 = vunpack.c.h.b16 %v954
    %v1653 = vunpack.c.l.b16 %v955
    %v1654 = vunpack.c.h.b16 %v955
    %v1655 = vunpack.c.l.b16 %v956
    %v1656 = vunpack.c.h.b16 %v956
    %v1657 = vunpack.c.l.b16 %v957
    %v1658 = vunpack.c.h.b16 %v957
    %v1659 = vunpack.c.l.b16 %v958
    %v1660 = vunpack.c.h.b16 %v958
    %v1661 = vunpack.c.l.b16 %v959
    %v1662 = vunpack.c.h.b16 %v959
    %v1663 = vunpack.c.l.b16 %v960
    %v1664 = vunpack.c.h.b16 %v960
    %v1665 = vunpack.c.l.b16 %v961
    %v1666 = vunpack.c.h.b16 %v961
    %v1667 = vunpack.c.l.b16 %v962
    %v1668 = vunpack.c.h.b16 %v962
    %v1669 = vunpack.c.l.b16 %v963
    %v1670 = vunpack.c.h.b16 %v963
    %v1671 = vunpack.c.l.b16 %v964
    %v1672 = vunpack.c.h.b16 %v964
    %v1673 = vunpack.c.l.b16 %v965
    %v1674 = vunpack.c.h.b16 %v965
    %v1675 = vunpack.c.l.b16 %v966
    %v1676 = vunpack.c.h.b16 %v966
    %v1677 = vunpack.c.l.b16 %v967
    %v1678 = vunpack.c.h.b16 %v967
    %v1679 = vunpack.c.l.b16 %v968
    %v1680 = vunpack.c.h.b16 %v968
    %v1681 = vunpack.c.l.b16 %v969
    %v1682 = vunpack.c.h.b16 %v969
    %v1683 = vunpack.c.l.b16 %v970
    %v1684 = vunpack.c.h.b16 %v970
    %v1685 = vunpack.c.l.b16 %v971
    %v1686 = vunpack.c.h.b16 %v971
    %v1687 = vunpack.c.l.b16 %v972
    %v1688 = vunpack.c.h.b16 %v972
    %v1689 = vunpack.c.l.b16 %v973
    %v1690 = vunpack.c.h.b16 %v973
    %v1691 = vunpack.c.l.b16 %v974
    %v1692 = vunpack.c.h.b16 %v974
    %v1693 = vunpack.c.l.b16 %v975
    %v1694 = vunpack.c.h.b16 %v975
    %v1695 = vunpack.c.l.b16 %v976
    %v1696 = vunpack.c.h.b16 %v976
    %v1697 = vunpack.c.l.b16 %v977
    %v1698 = vunpack.c.h.b16 %v977
    %v1699 = vunpack.c.l.b16 %v978
    %v1700 = vunpack.c.h.b16 %v978
    %v1701 = vunpack.c.l.b16 %v979
    %v1702 = vunpack.c.h.b16 %v979
    %v1703 = vunpack.c.l.b16 %v980
    %v1704 = vunpack.c.h.b16 %v980
    %v1705 = vunpack.c.l.b16 %v981
    %v1706 = vunpack.c.h.b16 %v981
    %v1707 = vunpack.c.l.b16 %v982
    %v1708 = vunpack.c.h.b16 %v982
    %v1709 = vunpack.c.l.b16 %v983
    %v1710 = vunpack.c.h.b16 %v983
    %v1711 = vunpack.c.l.b16 %v984
    %v1712 = vunpack.c.h.b16 %v984
    %v1713 = vunpack.c.l.b16 %v985
    %v1714 = vunpack.c.h.b16 %v985
    %v1715 = vunpack.c.l.b16 %v986
    %v1716 = vunpack.c.h.b16 %v986
    %v1717 = vunpack.c.l.b16 %v987
    %v1718 = vunpack.c.h.b16 %v987
    %v1719 = vunpack.c.l.b16 %v988
    %v1720 = vunpack.c.h.b16 %v988
    %v1721 = vunpack.c.l.b16 %v989
    %v1722 = vunpack.c.h.b16 %v989
    %v1723 = vunpack.c.l.b16 %v990
    %v1724 = vunpack.c.h.b16 %v990
    %v1725 = vunpack.c.l.b16 %v991
    %v1726 = vunpack.c.h.b16 %v991
    %v1727 = vunpack.c.l.b16 %v992
    %v1728 = vunpack.c.h.b16 %v992
    %v1729 = vunpack.c.l.b16 %v993
    %v1730 = vunpack.c.h.b16 %v993
    %v1731 = vunpack.c.l.b16 %v994
    %v1732 = vunpack.c.h.b16 %v994
    %v1733 = vunpack.c.l.b16 %v995
    %v1734 = vunpack.c.h.b16 %v995
    %v1735 = vunpack.c.l.b16 %v996
    %v1736 = vunpack.c.h.b16 %v996
    %v1737 = vunpack.c.l.b16 %v997
    %v1738 = vunpack.c.h.b16 %v997
    %v1739 = vunpack.c.l.b16 %v998
    %v1740 = vunpack.c.h.b16 %v998
    %v1741 = vunpack.c.l.b16 %v999
    %v1742 = vunpack.c.h.b16 %v999
    %v1743 = vunpack.c.l.b16 %v1000
    %v1744 = vunpack.c.h.b16 %v1000
    %v1745 = vunpack.c.l.b16 %v1001
    %v1746 = vunpack.c.h.b16 %v1001
    %v1747 = vunpack.c.l.b16 %v1002
    %v1748 = vunpack.c.h.b16 %v1002
    %v1749 = vunpack.c.l.b16 %v1003
    %v1750 = vunpack.c.h.b16 %v1003
    %v1751 = vunpack.c.l.b16 %v1004
    %v1752 = vunpack.c.h.b16 %v1004
    %v1753 = vunpack.c.l.b16 %v1005
    %v1754 = vunpack.c.h.b16 %v1005
    %v1755 = vunpack.c.l.b16 %v1006
    %v1756 = vunpack.c.h.b16 %v1006
    %v1757 = vunpack.c.l.b16 %v1007
    %v1758 = vunpack.c.h.b16 %v1007
    %v1759 = vunpack.c.l.b16 %v1008
    %v1760 = vunpack.c.h.b16 %v1008
    %v1761 = vunpack.c.l.b16 %v1009
    %v1762 = vunpack.c.h.b16 %v1009
    %v1763 = vunpack.c.l.b16 %v1010
    %v1764 = vunpack.c.h.b16 %v1010
    %v1765 = vunpack.c.l.b16 %v1011
    %v1766 = vunpack.c.h.b16 %v1011
    %v1767 = vunpack.c.l.b16 %v1012
    %v1768 = vunpack.c.h.b16 %v1012
    %v1769 = vunpack.c.l.b16 %v1013
    %v1770 = vunpack.c.h.b16 %v1013
    %v1771 = vunpack.c.l.b16 %v1014
    %v1772 = vunpack.c.h.b16 %v1014
    %v1773 = vunpack.c.l.b16 %v1015
    %v1774 = vunpack.c.h.b16 %v1015
    %v1775 = vunpack.c.l.b16 %v1016
    %v1776 = vunpack.c.h.b16 %v1016
    %v1777 = vunpack.c.l.b16 %v1017
    %v1778 = vunpack.c.h.b16 %v1017
    %v1779 = vunpack.c.l.b16 %v1018
    %v1780 = vunpack.c.h.b16 %v1018
    %v1781 = vunpack.c.l.b16 %v1019
    %v1782 = vunpack.c.h.b16 %v1019
    %v1783 = vunpack.c.l.b16 %v1020
    %v1784 = vunpack.c.h.b16 %v1020
    %v1785 = vunpack.c.l.b16 %v1021
    %v1786 = vunpack.c.h.b16 %v1021
    %v1787 = vunpack.c.l.b16 %v1022
    %v1788 = vunpack.c.h.b16 %v1022
    %v1789 = vunpack.c.l.b16 %v1023
    %v1790 = vunpack.c.h.b16 %v1023
    %v1791 = vunpack.c.l.b16 %v1024
    %v1792 = vunpack.c.h.b16 %v1024
    %v1793 = vpack.c.b16 %v1289, %v1281
    %v1794 = vpack.c.b16 %v1290, %v1282
    %v1795 = vpack.c.b16 %v1291, %v1283
    %v1796 = vpack.c.b16 %v1292, %v1284
    %v1797 = vpack.c.b16 %v1293, %v1285
    %v1798 = vpack.c.b16 %v1294, %v1286
    %v1799 = vpack.c.b16 %v1295, %v1287
    %v1800 = vpack.c.b16 %v1296, %v1288
    %v1801 = vpack.c.b16 %v1305, %v1297
    %v1802 = vpack.c.b16 %v1306, %v1298
    %v1803 = vpack.c.b16 %v1307, %v1299
    %v1804 = vpack.c.b16 %v1308, %v1300
    %v1805 = vpack.c.b16 %v1309, %v1301
    %v1806 = vpack.c.b16 %v1310, %v1302
    %v1807 = vpack.c.b16 %v1311, %v1303
    %v1808 = vpack.c.b16 %v1312, %v1304
    %v1809 = vpack.c.b16 %v1321, %v1313
    %v1810 = vpack.c.b16 %v1322, %v1314
    %v1811 = vpack.c.b16 %v1323, %v1315
    %v1812 = vpack.c.b16 %v1324, %v1316
    %v1813 = vpack.c.b16 %v1325, %v1317
    %v1814 = vpack.c.b16 %v1326, %v1318
    %v1815 = vpack.c.b16 %v1327, %v1319
    %v1816 = vpack.c.b16 %v1328, %v1320
    %v1817 = vpack.c.b16 %v1337, %v1329
    %v1818 = vpack.c.b16 %v1338, %v1330
    %v1819 = vpack.c.b16 %v1339, %v1331
    %v1820 = vpack.c.b16 %v1340, %v1332
    %v1821 = vpack.c.b16 %v1341, %v1333
    %v1822 = vpack.c.b16 %v1342, %v1334
    %v1823 = vpack.c.b16 %v1343, %v1335
    %v1824 = vpack.c.b16 %v1344, %v1336
    %v1825 = vpack.c.b16 %v1353, %v1345
    %v1826 = vpack.c.b16 %v1354, %v1346
    %v1827 = vpack.c.b16 %v1355, %v1347
    %v1828 = vpack.c.b16 %v1356, %v1348
    %v1829 = vpack.c.b16 %v1357, %v1349
    %v1830 = vpack.c.b16 %v1358, %v1350
    %v1831 = vpack.c.b16 %v1359, %v1351
    %v1832 = vpack.c.b16 %v1360, %v1352
    %v1833 = vpack.c.b16 %v1369, %v1361
    %v1834 = vpack.c.b16 %v1370, %v1362
    %v1835 = vpack.c.b16 %v1371, %v1363
    %v1836 = vpack.c.b16 %v1372, %v1364
    %v1837 = vpack.c.b16 %v1373, %v1365
    %v1838 = vpack.c.b16 %v1374, %v1366
    %v1839 = vpack.c.b16 %v1375, %v1367
    %v1840 = vpack.c.b16 %v1376, %v1368
    %v1841 = vpack.c.b16 %v1385, %v1377
    %v1842 = vpack.c.b16 %v1386, %v1378
    %v1843 = vpack.c.b16 %v1387, %v1379
    %v1844 = vpack.c.b16 %v1388, %v1380
    %v1845 = vpack.c.b16 %v1389, %v1381
    %v1846 = vpack.c.b16 %v1390, %v1382
    %v1847 = vpack.c.b16 %v1391, %v1383
    %v1848 = vpack.c.b16 %v1392, %v1384
    %v1849 = vpack.c.b16 %v1401, %v1393
    %v1850 = vpack.c.b16 %v1402, %v1394
    %v1851 = vpack.c.b16 %v1403, %v1395
    %v1852 = vpack.c.b16 %v1404, %v1396
    %v1853 = vpack.c.b16 %v1405, %v1397
    %v1854 = vpack.c.b16 %v1406, %v1398
    %v1855 = vpack.c.b16 %v1407, %v1399
    %v1856 = vpack.c.b16 %v1408, %v1400
    %v1857 = vpack.c.b16 %v1417, %v1409
    %v1858 = vpack.c.b16 %v1418, %v1410
    %v1859 = vpack.c.b16 %v1419, %v1411
    %v1860 = vpack.c.b16 %v1420, %v1412
    %v1861 = vpack.c.b16 %v1421, %v1413
    %v1862 = vpack.c.b16 %v1422, %v1414
    %v1863 = vpack.c.b16 %v1423, %v1415
    %v1864 = vpack.c.b16 %v1424, %v1416
    %v1865 = vpack.c.b16 %v1433, %v1425
    %v1866 = vpack.c.b16 %v1434, %v1426
    %v1867 = vpack.c.b16 %v1435, %v1427
    %v1868 = vpack.c.b16 %v1436, %v1428
    %v1869 = vpack.c.b16 %v1437, %v1429
    %v1870 = vpack.c.b16 %v1438, %v1430
    %v1871 = vpack.c.b16 %v1439, %v1431
    %v1872 = vpack.c.b16 %v1440, %v1432
    %v1873 = vpack.c.b16 %v1449, %v1441
    %v1874 = vpack.c.b16 %v1450, %v1442
    %v1875 = vpack.c.b16 %v1451, %v1443
    %v1876 = vpack.c.b16 %v1452, %v1444
    %v1877 = vpack.c.b16 %v1453, %v1445
    %v1878 = vpack.c.b16 %v1454, %v1446
    %v1879 = vpack.c.b16 %v1455, %v1447
    %v1880 = vpack.c.b16 %v1456, %v1448
    %v1881 = vpack.c.b16 %v1465, %v1457
    %v1882 = vpack.c.b16 %v1466, %v1458
    %v1883 = vpack.c.b16 %v1467, %v1459
    %v1884 = vpack.c.b16 %v1468, %v1460
    %v1885 = vpack.c.b16 %v1469, %v1461
    %v1886 = vpack.c.b16 %v1470, %v1462
    %v1887 = vpack.c.b16 %v1471, %v1463
    %v1888 = vpack.c.b16 %v1472, %v1464
    %v1889 = vpack.c.b16 %v1481, %v1473
    %v1890 = vpack.c.b16 %v1482, %v1474
    %v1891 = vpack.c.b16 %v1483, %v1475
    %v1892 = vpack.c.b16 %v1484, %v1476
    %v1893 = vpack.c.b16 %v1485, %v1477
    %v1894 = vpack.c.b16 %v1486, %v1478
    %v1895 = vpack.c.b16 %v1487, %v1479
    %v1896 = vpack.c.b16 %v1488, %v1480
    %v1897 = vpack.c.b16 %v1497, %v1489
    %v1898 = vpack.c.b16 %v1498, %v1490
    %v1899 = vpack.c.b16 %v1499, %v1491
    %v1900 = vpack.c.b16 %v1500, %v1492
    %v1901 = vpack.c.b16 %v1501, %v1493
    %v1902 = vpack.c.b16 %v1502, %v1494
    %v1903 = vpack.c.b16 %v1503, %v1495
    %v1904 = vpack.c.b16 %v1504, %v1496
    %v1905 = vpack.c.b16 %v1513, %v1505
    %v1906 = vpack.c.b16 %v1514, %v1506
    %v1907 = vpack.c.b16 %v1515, %v1507
    %v1908 = vpack.c.b16 %v1516, %v1508
    %v1909 = vpack.c.b16 %v1517, %v1509
    %v1910 = vpack.c.b16 %v1518, %v1510
    %v1911 = vpack.c.b16 %v1519, %v1511
    %v1912 = vpack.c.b16 %v1520, %v1512
    %v1913 = vpack.c.b16 %v1529, %v1521
    %v1914 = vpack.c.b16 %v1530, %v1522
    %v1915 = vpack.c.b16 %v1531, %v1523
    %v1916 = vpack.c.b16 %v1532, %v1524
    %v1917 = vpack.c.b16 %v1533, %v1525
    %v1918 = vpack.c.b16 %v1534, %v1526
    %v1919 = vpack.c.b16 %v1535, %v1527
    %v1920 = vpack.c.b16 %v1536, %v1528
    %v1921 = vpack.c.b16 %v1545, %v1537
    %v1922 = vpack.c.b16 %v1546, %v1538
    %v1923 = vpack.c.b16 %v1547, %v1539
    %v1924 = vpack.c.b16 %v1548, %v1540
    %v1925 = vpack.c.b16 %v1549, %v1541
    %v1926 = vpack.c.b16 %v1550, %v1542
    %v1927 = vpack.c.b16 %v1551, %v1543
    %v1928 = vpack.c.b16 %v1552, %v1544
    %v1929 = vpack.c.b16 %v1561, %v1553
    %v1930 = vpack.c.b16 %v1562, %v1554
    %v1931 = vpack.c.b16 %v1563, %v1555
    %v1932 = vpack.c.b16 %v1564, %v1556
    %v1933 = vpack.c.b16 %v1565, %v1557
    %v1934 = vpack.c.b16 %v1566, %v1558
    %v1935 = vpack.c.b16 %v1567, %v1559
    %v1936 = vpack.c.b16 %v1568, %v1560
    %v1937 = vpack.c.b16 %v1577, %v1569
    %v1938 = vpack.c.b16 %v1578, %v1570
    %v1939 = vpack.c.b16 %v1579, %v1571
    %v1940 = vpack.c.b16 %v1580, %v1572
    %v1941 = vpack.c.b16 %v1581, %v1573
    %v1942 = vpack.c.b16 %v1582, %v1574
    %v1943 = vpack.c.b16 %v1583, %v1575
    %v1944 = vpack.c.b16 %v1584, %v1576
    %v1945 = vpack.c.b16 %v1593, %v1585
    %v1946 = vpack.c.b16 %v1594, %v1586
    %v1947 = vpack.c.b16 %v1595, %v1587
    %v1948 = vpack.c.b16 %v1596, %v1588
    %v1949 = vpack.c.b16 %v1597, %v1589
    %v1950 = vpack.c.b16 %v1598, %v1590
    %v1951 = vpack.c.b16 %v1599, %v1591
    %v1952 = vpack.c.b16 %v1600, %v1592
    %v1953 = vpack.c.b16 %v1609, %v1601
    %v1954 = vpack.c.b16 %v1610, %v1602
    %v1955 = vpack.c.b16 %v1611, %v1603
    %v1956 = vpack.c.b16 %v1612, %v1604
    %v1957 = vpack.c.b16 %v1613, %v1605
    %v1958 = vpack.c.b16 %v1614, %v1606
    %v1959 = vpack.c.b16 %v1615, %v1607
    %v1960 = vpack.c.b16 %v1616, %v1608
    %v1961 = vpack.c.b16 %v1625, %v1617
    %v1962 = vpack.c.b16 %v1626, %v1618
    %v1963 = vpack.c.b16 %v1627, %v1619
    %v1964 = vpack.c.b16 %v1628, %v1620
    %v1965 = vpack.c.b16 %v1629, %v1621
    %v1966 = vpack.c.b16 %v1630, %v1622
    %v1967 = vpack.c.b16 %v1631, %v1623
    %v1968 = vpack.c.b16 %v1632, %v1624
    %v1969 = vpack.c.b16 %v1641, %v1633
    %v1970 = vpack.c.b16 %v1642, %v1634
    %v1971 = vpack.c.b16 %v1643, %v1635
    %v1972 = vpack.c.b16 %v1644, %v1636
    %v1973 = vpack.c.b16 %v1645, %v1637
    %v1974 = vpack.c.b16 %v1646, %v1638
    %v1975 = vpack.c.b16 %v1647, %v1639
    %v1976 = vpack.c.b16 %v1648, %v1640
    %v1977 = vpack.c.b16 %v1657, %v1649
    %v1978 = vpack.c.b16 %v1658, %v1650
    %v1979 = vpack.c.b16 %v1659, %v1651
    %v1980 = vpack.c.b16 %v1660, %v1652
    %v1981 = vpack.c.b16 %v1661, %v1653
    %v1982 = vpack.c.b16 %v1662, %v1654
    %v1983 = vpack.c.b16 %v1663, %v1655
    %v1984 = vpack.c.b16 %v1664, %v1656
    %v1985 = vpack.c.b16 %v1673, %v1665
    %v1986 = vpack.c.b16 %v1674, %v1666
    %v1987 = vpack.c.b16 %v1675, %v1667
    %v1988 = vpack.c.b16 %v1676, %v1668
    %v1989 = vpack.c.b16 %v1677, %v1669
    %v1990 = vpack.c.b16 %v1678, %v1670
    %v1991 = vpack.c.b16 %v1679, %v1671
    %v1992 = vpack.c.b16 %v1680, %v1672
    %v1993 = vpack.c.b16 %v1689, %v1681
    %v1994 = vpack.c.b16 %v1690, %v1682
    %v1995 = vpack.c.b16 %v1691, %v1683
    %v1996 = vpack.c.b16 %v1692, %v1684
    %v1997 = vpack.c.b16 %v1693, %v1685
    %v1998 = vpack.c.b16 %v1694, %v1686
    %v1999 = vpack.c.b16 %v1695, %v1687
    %v2000 = vpack.c.b16 %v1696, %v1688
    %v2001 = vpack.c.b16 %v1705, %v1697
    %v2002 = vpack.c.b16 %v1706, %v1698
    %v2003 = vpack.c.b16 %v1707, %v1699
    %v2004 = vpack.c.b16 %v1708, %v1700
    %v2005 = vpack.c.b16 %v1709, %v1701
    %v2006 = vpack.c.b16 %v1710, %v1702
    %v2007 = vpack.c.b16 %v1711, %v1703
    %v2008 = vpack.c.b16 %v1712, %v1704
    %v2009 = vpack.c.b16 %v1721, %v1713
    %v2010 = vpack.c.b16 %v1722, %v1714
    %v2011 = vpack.c.b16 %v1723, %v1715
    %v2012 = vpack.c.b16 %v1724, %v1716
    %v2013 = vpack.c.b16 %v1725, %v1717
    %v2014 = vpack.c.b16 %v1726, %v1718
    %v2015 = vpack.c.b16 %v1727, %v1719
    %v2016 = vpack.c.b16 %v1728, %v1720
    %v2017 = vpack.c.b16 %v1737, %v1729
    %v2018 = vpack.c.b16 %v1738, %v1730
    %v2019 = vpack.c.b16 %v1739, %v1731
    %v2020 = vpack.c.b16 %v1740, %v1732
    %v2021 = vpack.c.b16 %v1741, %v1733
    %v2022 = vpack.c.b16 %v1742, %v1734
    %v2023 = vpack.c.b16 %v1743, %v1735
    %v2024 = vpack.c.b16 %v1744, %v1736
    %v2025 = vpack.c.b16 %v1753, %v1745
    %v2026 = vpack.c.b16 %v1754, %v1746
    %v2027 = vpack.c.b16 %v1755, %v1747
    %v2028 = vpack.c.b16 %v1756, %v1748
    %v2029 = vpack.c.b16 %v1757, %v1749
    %v2030 = vpack.c.b16 %v1758, %v1750
    %v2031 = vpack.c.b16 %v1759, %v1751
    %v2032 = vpack.c.b16 %v1760, %v1752
    %v2033 = vpack.c.b16 %v1769, %v1761
    %v2034 = vpack.c.b16 %v1770, %v1762
    %v2035 = vpack.c.b16 %v1771, %v1763
    %v2036 = vpack.c.b16 %v1772, %v1764
    %v2037 = vpack.c.b16 %v1773, %v1765
    %v2038 = vpack.c.b16 %v1774, %v1766
    %v2039 = vpack.c.b16 %v1775, %v1767
    %v2040 = vpack.c.b16 %v1776, %v1768
    %v2041 = vpack.c.b16 %v1785, %v1777
    %v2042 = vpack.c.b16 %v1786, %v1778
    %v2043 = vpack.c.b16 %v1787, %v1779
    %v2044 = vpack.c.b16 %v1788, %v1780
    %v2045 = vpack.c.b16 %v1789, %v1781
    %v2046 = vpack.c.b16 %v1790, %v1782
    %v2047 = vpack.c.b16 %v1791, %v1783
    %v2048 = vpack.c.b16 %v1792, %v1784
    %2305 = vmatprep.subr.bf16.mxu0 %v1794
    %2306 = vmatpush1.bf16.msra.mxu0 %v1793
    %2307 = vmatprep.subr.bf16.mxu0 %v1802
    %2308 = vmatpush1.bf16.msra.mxu0 %v1801
    %2309 = vmatprep.subr.bf16.mxu0 %v1810
    %2310 = vmatpush1.bf16.msra.mxu0 %v1809
    %2311 = vmatprep.subr.bf16.mxu0 %v1818
    %2312 = vmatpush1.bf16.msra.mxu0 %v1817
    %2313 = vmatprep.subr.bf16.mxu0 %v1826
    %2314 = vmatpush1.bf16.msra.mxu0 %v1825
    %2315 = vmatprep.subr.bf16.mxu0 %v1834
    %2316 = vmatpush1.bf16.msra.mxu0 %v1833
    %2317 = vmatprep.subr.bf16.mxu0 %v1842
    %2318 = vmatpush1.bf16.msra.mxu0 %v1841
    %2319 = vmatprep.subr.bf16.mxu0 %v1850
    %2320 = vmatpush1.bf16.msra.mxu0 %v1849
    %2321 = vmatprep.subr.bf16.mxu0 %v1858
    %2322 = vmatpush1.bf16.msra.mxu0 %v1857
    %2323 = vmatprep.subr.bf16.mxu0 %v1866
    %2324 = vmatpush1.bf16.msra.mxu0 %v1865
    %2325 = vmatprep.subr.bf16.mxu0 %v1874
    %2326 = vmatpush1.bf16.msra.mxu0 %v1873
    %2327 = vmatprep.subr.bf16.mxu0 %v1882
    %2328 = vmatpush1.bf16.msra.mxu0 %v1881
    %2329 = vmatprep.subr.bf16.mxu0 %v1890
    %2330 = vmatpush1.bf16.msra.mxu0 %v1889
    %2331 = vmatprep.subr.bf16.mxu0 %v1898
    %2332 = vmatpush1.bf16.msra.mxu0 %v1897
    %2333 = vmatprep.subr.bf16.mxu0 %v1906
    %2334 = vmatpush1.bf16.msra.mxu0 %v1905
    %2335 = vmatprep.subr.bf16.mxu0 %v1914
    %2336 = vmatpush1.bf16.msra.mxu0 %v1913
    %2337 = vmatprep.mubr.bf16.mxu0 %v766
    %2338 = vmatmul.mubr.bf16.gmra.mrb[0].mxu0 %v765
    %v2339 = vpop.f32.mrb[0].mxu0
    %v2340 = vadd.f32 0.0, %v2339
    %v2341 = vpop.f32.mrb[0].mxu0
    %v2342 = vadd.f32 0.0, %v2341
    %v2343 = vpop.f32.mrb[0].mxu0
    %v2344 = vadd.f32 0.0, %v2343
    %v2345 = vpop.f32.mrb[0].mxu0
    %v2346 = vadd.f32 0.0, %v2345
    %2347 = vdwg.mxu0
    %2348 = vmatprep.subr.bf16.mxu0 %v1922
    %2349 = vmatpush1.bf16.msra.mxu0 %v1921
    %2350 = vmatprep.subr.bf16.mxu0 %v1930
    %2351 = vmatpush1.bf16.msra.mxu0 %v1929
    %2352 = vmatprep.subr.bf16.mxu0 %v1938
    %2353 = vmatpush1.bf16.msra.mxu0 %v1937
    %2354 = vmatprep.subr.bf16.mxu0 %v1946
    %2355 = vmatpush1.bf16.msra.mxu0 %v1945
    %2356 = vmatprep.subr.bf16.mxu0 %v1954
    %2357 = vmatpush1.bf16.msra.mxu0 %v1953
    %2358 = vmatprep.subr.bf16.mxu0 %v1962
    %2359 = vmatpush1.bf16.msra.mxu0 %v1961
    %2360 = vmatprep.subr.bf16.mxu0 %v1970
    %2361 = vmatpush1.bf16.msra.mxu0 %v1969
    %2362 = vmatprep.subr.bf16.mxu0 %v1978
    %2363 = vmatpush1.bf16.msra.mxu0 %v1977
    %2364 = vmatprep.subr.bf16.mxu0 %v1986
    %2365 = vmatpush1.bf16.msra.mxu0 %v1985
    %2366 = vmatprep.subr.bf16.mxu0 %v1994
    %2367 = vmatpush1.bf16.msra.mxu0 %v1993
    %2368 = vmatprep.subr.bf16.mxu0 %v2002
    %2369 = vmatpush1.bf16.msra.mxu0 %v2001
    %2370 = vmatprep.subr.bf16.mxu0 %v2010
    %2371 = vmatpush1.bf16.msra.mxu0 %v2009
    %2372 = vmatprep.subr.bf16.mxu0 %v2018
    %2373 = vmatpush1.bf16.msra.mxu0 %v2017
    %2374 = vmatprep.subr.bf16.mxu0 %v2026
    %2375 = vmatpush1.bf16.msra.mxu0 %v2025
    %2376 = vmatprep.subr.bf16.mxu0 %v2034
    %2377 = vmatpush1.bf16.msra.mxu0 %v2033
    %2378 = vmatprep.subr.bf16.mxu0 %v2042
    %2379 = vmatpush1.bf16.msra.mxu0 %v2041
    %2380 = vmatprep.mubr.bf16.mxu0 %v768
    %2381 = vmatmul.mubr.bf16.gmra.mrb[0].mxu0 %v767
    %v2382 = vpop.f32.mrb[0].mxu0
    %v2383 = vadd.f32 %v2340, %v2382
    %v2384 = vpop.f32.mrb[0].mxu0
    %v2385 = vadd.f32 %v2342, %v2384
    %v2386 = vpop.f32.mrb[0].mxu0
    %v2387 = vadd.f32 %v2344, %v2386
    %v2388 = vpop.f32.mrb[0].mxu0
    %v2389 = vadd.f32 %v2346, %v2388
    %2390 = vdwg.mxu0
    %2391 = vmatprep.subr.bf16.mxu0 %v1796
    %2392 = vmatpush1.bf16.msra.mxu0 %v1795
    %2393 = vmatprep.subr.bf16.mxu0 %v1804
    %2394 = vmatpush1.bf16.msra.mxu0 %v1803
    %2395 = vmatprep.subr.bf16.mxu0 %v1812
    %2396 = vmatpush1.bf16.msra.mxu0 %v1811
    %2397 = vmatprep.subr.bf16.mxu0 %v1820
    %2398 = vmatpush1.bf16.msra.mxu0 %v1819
    %2399 = vmatprep.subr.bf16.mxu0 %v1828
    %2400 = vmatpush1.bf16.msra.mxu0 %v1827
    %2401 = vmatprep.subr.bf16.mxu0 %v1836
    %2402 = vmatpush1.bf16.msra.mxu0 %v1835
    %2403 = vmatprep.subr.bf16.mxu0 %v1844
    %2404 = vmatpush1.bf16.msra.mxu0 %v1843
    %2405 = vmatprep.subr.bf16.mxu0 %v1852
    %2406 = vmatpush1.bf16.msra.mxu0 %v1851
    %2407 = vmatprep.subr.bf16.mxu0 %v1860
    %2408 = vmatpush1.bf16.msra.mxu0 %v1859
    %2409 = vmatprep.subr.bf16.mxu0 %v1868
    %2410 = vmatpush1.bf16.msra.mxu0 %v1867
    %2411 = vmatprep.subr.bf16.mxu0 %v1876
    %2412 = vmatpush1.bf16.msra.mxu0 %v1875
    %2413 = vmatprep.subr.bf16.mxu0 %v1884
    %2414 = vmatpush1.bf16.msra.mxu0 %v1883
    %2415 = vmatprep.subr.bf16.mxu0 %v1892
    %2416 = vmatpush1.bf16.msra.mxu0 %v1891
    %2417 = vmatprep.subr.bf16.mxu0 %v1900
    %2418 = vmatpush1.bf16.msra.mxu0 %v1899
    %2419 = vmatprep.subr.bf16.mxu0 %v1908
    %2420 = vmatpush1.bf16.msra.mxu0 %v1907
    %2421 = vmatprep.subr.bf16.mxu0 %v1916
    %2422 = vmatpush1.bf16.msra.mxu0 %v1915
    %2423 = vmatprep.mubr.bf16.mxu0 %v766
    %2424 = vmatmul.mubr.bf16.gmra.mrb[0].mxu0 %v765
    %v2425 = vpop.f32.mrb[0].mxu0
    %v2426 = vadd.f32 0.0, %v2425
    %v2427 = vpop.f32.mrb[0].mxu0
    %v2428 = vadd.f32 0.0, %v2427
    %v2429 = vpop.f32.mrb[0].mxu0
    %v2430 = vadd.f32 0.0, %v2429
    %v2431 = vpop.f32.mrb[0].mxu0
    %v2432 = vadd.f32 0.0, %v2431
    %2433 = vdwg.mxu0
    %2434 = vmatprep.subr.bf16.mxu0 %v1924
    %2435 = vmatpush1.bf16.msra.mxu0 %v1923
    %2436 = vmatprep.subr.bf16.mxu0 %v1932
    %2437 = vmatpush1.bf16.msra.mxu0 %v1931
    %2438 = vmatprep.subr.bf16.mxu0 %v1940
    %2439 = vmatpush1.bf16.msra.mxu0 %v1939
    %2440 = vmatprep.subr.bf16.mxu0 %v1948
    %2441 = vmatpush1.bf16.msra.mxu0 %v1947
    %2442 = vmatprep.subr.bf16.mxu0 %v1956
    %2443 = vmatpush1.bf16.msra.mxu0 %v1955
    %2444 = vmatprep.subr.bf16.mxu0 %v1964
    %2445 = vmatpush1.bf16.msra.mxu0 %v1963
    %2446 = vmatprep.subr.bf16.mxu0 %v1972
    %2447 = vmatpush1.bf16.msra.mxu0 %v1971
    %2448 = vmatprep.subr.bf16.mxu0 %v1980
    %2449 = vmatpush1.bf16.msra.mxu0 %v1979
    %2450 = vmatprep.subr.bf16.mxu0 %v1988
    %2451 = vmatpush1.bf16.msra.mxu0 %v1987
    %2452 = vmatprep.subr.bf16.mxu0 %v1996
    %2453 = vmatpush1.bf16.msra.mxu0 %v1995
    %2454 = vmatprep.subr.bf16.mxu0 %v2004
    %2455 = vmatpush1.bf16.msra.mxu0 %v2003
    %2456 = vmatprep.subr.bf16.mxu0 %v2012
    %2457 = vmatpush1.bf16.msra.mxu0 %v2011
    %2458 = vmatprep.subr.bf16.mxu0 %v2020
    %2459 = vmatpush1.bf16.msra.mxu0 %v2019
    %2460 = vmatprep.subr.bf16.mxu0 %v2028
    %2461 = vmatpush1.bf16.msra.mxu0 %v2027
    %2462 = vmatprep.subr.bf16.mxu0 %v2036
    %2463 = vmatpush1.bf16.msra.mxu0 %v2035
    %2464 = vmatprep.subr.bf16.mxu0 %v2044
    %2465 = vmatpush1.bf16.msra.mxu0 %v2043
    %2466 = vmatprep.mubr.bf16.mxu0 %v768
    %2467 = vmatmul.mubr.bf16.gmra.mrb[0].mxu0 %v767
    %v2468 = vpop.f32.mrb[0].mxu0
    %v2469 = vadd.f32 %v2426, %v2468
    %v2470 = vpop.f32.mrb[0].mxu0
    %v2471 = vadd.f32 %v2428, %v2470
    %v2472 = vpop.f32.mrb[0].mxu0
    %v2473 = vadd.f32 %v2430, %v2472
    %v2474 = vpop.f32.mrb[0].mxu0
    %v2475 = vadd.f32 %v2432, %v2474
    %2476 = vdwg.mxu0
    %2477 = vmatprep.subr.bf16.mxu0 %v1798
    %2478 = vmatpush1.bf16.msra.mxu0 %v1797
    %2479 = vmatprep.subr.bf16.mxu0 %v1806
    %2480 = vmatpush1.bf16.msra.mxu0 %v1805
    %2481 = vmatprep.subr.bf16.mxu0 %v1814
    %2482 = vmatpush1.bf16.msra.mxu0 %v1813
    %2483 = vmatprep.subr.bf16.mxu0 %v1822
    %2484 = vmatpush1.bf16.msra.mxu0 %v1821
    %2485 = vmatprep.subr.bf16.mxu0 %v1830
    %2486 = vmatpush1.bf16.msra.mxu0 %v1829
    %2487 = vmatprep.subr.bf16.mxu0 %v1838
    %2488 = vmatpush1.bf16.msra.mxu0 %v1837
    %2489 = vmatprep.subr.bf16.mxu0 %v1846
    %2490 = vmatpush1.bf16.msra.mxu0 %v1845
    %2491 = vmatprep.subr.bf16.mxu0 %v1854
    %2492 = vmatpush1.bf16.msra.mxu0 %v1853
    %2493 = vmatprep.subr.bf16.mxu0 %v1862
    %2494 = vmatpush1.bf16.msra.mxu0 %v1861
    %2495 = vmatprep.subr.bf16.mxu0 %v1870
    %2496 = vmatpush1.bf16.msra.mxu0 %v1869
    %2497 = vmatprep.subr.bf16.mxu0 %v1878
    %2498 = vmatpush1.bf16.msra.mxu0 %v1877
    %2499 = vmatprep.subr.bf16.mxu0 %v1886
    %2500 = vmatpush1.bf16.msra.mxu0 %v1885
    %2501 = vmatprep.subr.bf16.mxu0 %v1894
    %2502 = vmatpush1.bf16.msra.mxu0 %v1893
    %2503 = vmatprep.subr.bf16.mxu0 %v1902
    %2504 = vmatpush1.bf16.msra.mxu0 %v1901
    %2505 = vmatprep.subr.bf16.mxu0 %v1910
    %2506 = vmatpush1.bf16.msra.mxu0 %v1909
    %2507 = vmatprep.subr.bf16.mxu0 %v1918
    %2508 = vmatpush1.bf16.msra.mxu0 %v1917
    %2509 = vmatprep.mubr.bf16.mxu0 %v766
    %2510 = vmatmul.mubr.bf16.gmra.mrb[0].mxu0 %v765
    %v2511 = vpop.f32.mrb[0].mxu0
    %v2512 = vadd.f32 0.0, %v2511
    %v2513 = vpop.f32.mrb[0].mxu0
    %v2514 = vadd.f32 0.0, %v2513
    %v2515 = vpop.f32.mrb[0].mxu0
    %v2516 = vadd.f32 0.0, %v2515
    %v2517 = vpop.f32.mrb[0].mxu0
    %v2518 = vadd.f32 0.0, %v2517
    %2519 = vdwg.mxu0
    %2520 = vmatprep.subr.bf16.mxu0 %v1926
    %2521 = vmatpush1.bf16.msra.mxu0 %v1925
    %2522 = vmatprep.subr.bf16.mxu0 %v1934
    %2523 = vmatpush1.bf16.msra.mxu0 %v1933
    %2524 = vmatprep.subr.bf16.mxu0 %v1942
    %2525 = vmatpush1.bf16.msra.mxu0 %v1941
    %2526 = vmatprep.subr.bf16.mxu0 %v1950
    %2527 = vmatpush1.bf16.msra.mxu0 %v1949
    %2528 = vmatprep.subr.bf16.mxu0 %v1958
    %2529 = vmatpush1.bf16.msra.mxu0 %v1957
    %2530 = vmatprep.subr.bf16.mxu0 %v1966
    %2531 = vmatpush1.bf16.msra.mxu0 %v1965
    %2532 = vmatprep.subr.bf16.mxu0 %v1974
    %2533 = vmatpush1.bf16.msra.mxu0 %v1973
    %2534 = vmatprep.subr.bf16.mxu0 %v1982
    %2535 = vmatpush1.bf16.msra.mxu0 %v1981
    %2536 = vmatprep.subr.bf16.mxu0 %v1990
    %2537 = vmatpush1.bf16.msra.mxu0 %v1989
    %2538 = vmatprep.subr.bf16.mxu0 %v1998
    %2539 = vmatpush1.bf16.msra.mxu0 %v1997
    %2540 = vmatprep.subr.bf16.mxu0 %v2006
    %2541 = vmatpush1.bf16.msra.mxu0 %v2005
    %2542 = vmatprep.subr.bf16.mxu0 %v2014
    %2543 = vmatpush1.bf16.msra.mxu0 %v2013
    %2544 = vmatprep.subr.bf16.mxu0 %v2022
    %2545 = vmatpush1.bf16.msra.mxu0 %v2021
    %2546 = vmatprep.subr.bf16.mxu0 %v2030
    %2547 = vmatpush1.bf16.msra.mxu0 %v2029
    %2548 = vmatprep.subr.bf16.mxu0 %v2038
    %2549 = vmatpush1.bf16.msra.mxu0 %v2037
    %2550 = vmatprep.subr.bf16.mxu0 %v2046
    %2551 = vmatpush1.bf16.msra.mxu0 %v2045
    %2552 = vmatprep.mubr.bf16.mxu0 %v768
    %2553 = vmatmul.mubr.bf16.gmra.mrb[0].mxu0 %v767
    %v2554 = vpop.f32.mrb[0].mxu0
    %v2555 = vadd.f32 %v2512, %v2554
    %v2556 = vpop.f32.mrb[0].mxu0
    %v2557 = vadd.f32 %v2514, %v2556
    %v2558 = vpop.f32.mrb[0].mxu0
    %v2559 = vadd.f32 %v2516, %v2558
    %v2560 = vpop.f32.mrb[0].mxu0
    %v2561 = vadd.f32 %v2518, %v2560
    %2562 = vdwg.mxu0
    %2563 = vmatprep.subr.bf16.mxu0 %v1800
    %2564 = vmatpush1.bf16.msra.mxu0 %v1799
    %2565 = vmatprep.subr.bf16.mxu0 %v1808
    %2566 = vmatpush1.bf16.msra.mxu0 %v1807
    %2567 = vmatprep.subr.bf16.mxu0 %v1816
    %2568 = vmatpush1.bf16.msra.mxu0 %v1815
    %2569 = vmatprep.subr.bf16.mxu0 %v1824
    %2570 = vmatpush1.bf16.msra.mxu0 %v1823
    %2571 = vmatprep.subr.bf16.mxu0 %v1832
    %2572 = vmatpush1.bf16.msra.mxu0 %v1831
    %2573 = vmatprep.subr.bf16.mxu0 %v1840
    %2574 = vmatpush1.bf16.msra.mxu0 %v1839
    %2575 = vmatprep.subr.bf16.mxu0 %v1848
    %2576 = vmatpush1.bf16.msra.mxu0 %v1847
    %2577 = vmatprep.subr.bf16.mxu0 %v1856
    %2578 = vmatpush1.bf16.msra.mxu0 %v1855
    %2579 = vmatprep.subr.bf16.mxu0 %v1864
    %2580 = vmatpush1.bf16.msra.mxu0 %v1863
    %2581 = vmatprep.subr.bf16.mxu0 %v1872
    %2582 = vmatpush1.bf16.msra.mxu0 %v1871
    %2583 = vmatprep.subr.bf16.mxu0 %v1880
    %2584 = vmatpush1.bf16.msra.mxu0 %v1879
    %2585 = vmatprep.subr.bf16.mxu0 %v1888
    %2586 = vmatpush1.bf16.msra.mxu0 %v1887
    %2587 = vmatprep.subr.bf16.mxu0 %v1896
    %2588 = vmatpush1.bf16.msra.mxu0 %v1895
    %2589 = vmatprep.subr.bf16.mxu0 %v1904
    %2590 = vmatpush1.bf16.msra.mxu0 %v1903
    %2591 = vmatprep.subr.bf16.mxu0 %v1912
    %2592 = vmatpush1.bf16.msra.mxu0 %v1911
    %2593 = vmatprep.subr.bf16.mxu0 %v1920
    %2594 = vmatpush1.bf16.msra.mxu0 %v1919
    %2595 = vmatprep.mubr.bf16.mxu0 %v766
    %2596 = vmatmul.mubr.bf16.gmra.mrb[0].mxu0 %v765
    %v2597 = vpop.f32.mrb[0].mxu0
    %v2598 = vadd.f32 0.0, %v2597
    %v2599 = vpop.f32.mrb[0].mxu0
    %v2600 = vadd.f32 0.0, %v2599
    %v2601 = vpop.f32.mrb[0].mxu0
    %v2602 = vadd.f32 0.0, %v2601
    %v2603 = vpop.f32.mrb[0].mxu0
    %v2604 = vadd.f32 0.0, %v2603
    %2605 = vdwg.mxu0
    %2606 = vmatprep.subr.bf16.mxu0 %v1928
    %2607 = vmatpush1.bf16.msra.mxu0 %v1927
    %2608 = vmatprep.subr.bf16.mxu0 %v1936
    %2609 = vmatpush1.bf16.msra.mxu0 %v1935
    %2610 = vmatprep.subr.bf16.mxu0 %v1944
    %2611 = vmatpush1.bf16.msra.mxu0 %v1943
    %2612 = vmatprep.subr.bf16.mxu0 %v1952
    %2613 = vmatpush1.bf16.msra.mxu0 %v1951
    %2614 = vmatprep.subr.bf16.mxu0 %v1960
    %2615 = vmatpush1.bf16.msra.mxu0 %v1959
    %2616 = vmatprep.subr.bf16.mxu0 %v1968
    %2617 = vmatpush1.bf16.msra.mxu0 %v1967
    %2618 = vmatprep.subr.bf16.mxu0 %v1976
    %2619 = vmatpush1.bf16.msra.mxu0 %v1975
    %2620 = vmatprep.subr.bf16.mxu0 %v1984
    %2621 = vmatpush1.bf16.msra.mxu0 %v1983
    %2622 = vmatprep.subr.bf16.mxu0 %v1992
    %2623 = vmatpush1.bf16.msra.mxu0 %v1991
    %2624 = vmatprep.subr.bf16.mxu0 %v2000
    %2625 = vmatpush1.bf16.msra.mxu0 %v1999
    %2626 = vmatprep.subr.bf16.mxu0 %v2008
    %2627 = vmatpush1.bf16.msra.mxu0 %v2007
    %2628 = vmatprep.subr.bf16.mxu0 %v2016
    %2629 = vmatpush1.bf16.msra.mxu0 %v2015
    %2630 = vmatprep.subr.bf16.mxu0 %v2024
    %2631 = vmatpush1.bf16.msra.mxu0 %v2023
    %2632 = vmatprep.subr.bf16.mxu0 %v2032
    %2633 = vmatpush1.bf16.msra.mxu0 %v2031
    %2634 = vmatprep.subr.bf16.mxu0 %v2040
    %2635 = vmatpush1.bf16.msra.mxu0 %v2039
    %2636 = vmatprep.subr.bf16.mxu0 %v2048
    %2637 = vmatpush1.bf16.msra.mxu0 %v2047
    %2638 = vmatprep.mubr.bf16.mxu0 %v768
    %2639 = vmatmul.mubr.bf16.gmra.mrb[0].mxu0 %v767
    %v2640 = vpop.f32.mrb[0].mxu0
    %v2641 = vadd.f32 %v2598, %v2640
    %v2642 = vpop.f32.mrb[0].mxu0
    %v2643 = vadd.f32 %v2600, %v2642
    %v2644 = vpop.f32.mrb[0].mxu0
    %v2645 = vadd.f32 %v2602, %v2644
    %v2646 = vpop.f32.mrb[0].mxu0
    %v2647 = vadd.f32 %v2604, %v2646
    %2648 = vdwg.mxu0
    %v2649 = vpack.c.bf16 %v2387, %v2383
    %v2650 = vpack.c.bf16 %v2389, %v2385
    %v2651 = vpack.c.bf16 %v2473, %v2469
    %v2652 = vpack.c.bf16 %v2475, %v2471
    %v2653 = vpack.c.bf16 %v2559, %v2555
    %v2654 = vpack.c.bf16 %v2561, %v2557
    %v2655 = vpack.c.bf16 %v2645, %v2641
    %v2656 = vpack.c.bf16 %v2647, %v2643
    %v2657 = vld [vmem:[%s6] sm:$0xff]
    %v2659 = vcombine.high %v2657, %v2657
    %v2661 = vunpack.c.l.s4 1966171168
    %v2662 = vunpack.c.0.s8 %v2661
    %v2663 = vlaneseq
    %v2664 = vshrl.u32 %v2663, 7
    %v2665 = vsub.s32 %v2662, %v2664
    %v2666 = vrot.slane %v2657, %v2665
    %v2668 = vunpack.c.l.s4 1966171168
    %v2669 = vunpack.c.0.s8 %v2668
    %v2670 = vlaneseq
    %v2671 = vshrl.u32 %v2670, 7
    %v2672 = vsub.s32 %v2669, %v2671
    %v2673 = vrot.slane %v2659, %v2672
    %v2674 = vcombine.high %v2666, %v2666
    %v2675 = vcombine.high %v2673, %v2673
    %v2677 = vunpack.c.l.s4 1966171168
    %v2678 = vunpack.c.0.s8 %v2677
    %v2679 = vlaneseq
    %v2680 = vshrl.u32 %v2679, 7
    %v2681 = vsub.s32 %v2678, %v2680
    %v2682 = vrot.slane %v2666, %v2681
    %v2684 = vunpack.c.l.s4 1966171168
    %v2685 = vunpack.c.0.s8 %v2684
    %v2686 = vlaneseq
    %v2687 = vshrl.u32 %v2686, 7
    %v2688 = vsub.s32 %v2685, %v2687
    %v2689 = vrot.slane %v2673, %v2688
    %v2691 = vunpack.c.l.s4 1966171168
    %v2692 = vunpack.c.0.s8 %v2691
    %v2693 = vlaneseq
    %v2694 = vshrl.u32 %v2693, 7
    %v2695 = vsub.s32 %v2692, %v2694
    %v2696 = vrot.slane %v2674, %v2695
    %v2698 = vunpack.c.l.s4 1966171168
    %v2699 = vunpack.c.0.s8 %v2698
    %v2700 = vlaneseq
    %v2701 = vshrl.u32 %v2700, 7
    %v2702 = vsub.s32 %v2699, %v2701
    %v2703 = vrot.slane %v2675, %v2702
    %v2704 = vcombine.high %v2682, %v2682
    %v2705 = vcombine.high %v2689, %v2689
    %v2706 = vcombine.high %v2696, %v2696
    %v2707 = vcombine.high %v2703, %v2703
    %v2709 = vpack.i.b16 %v2682, %v2682
    %v2711 = vlaneseq
    %v2712 = vshrl.u32 %v2711, 7
    %v2713 = vsub.s32 0, %v2712
    %v2714 = vrot.slane %v2709, %v2713
    %v2716 = vpack.i.b16 %v2696, %v2696
    %v2718 = vlaneseq
    %v2719 = vshrl.u32 %v2718, 7
    %v2720 = vsub.s32 0, %v2719
    %v2721 = vrot.slane %v2716, %v2720
    %v2723 = vpack.i.b16 %v2704, %v2704
    %v2725 = vlaneseq
    %v2726 = vshrl.u32 %v2725, 7
    %v2727 = vsub.s32 0, %v2726
    %v2728 = vrot.slane %v2723, %v2727
    %v2730 = vpack.i.b16 %v2706, %v2706
    %v2732 = vlaneseq
    %v2733 = vshrl.u32 %v2732, 7
    %v2734 = vsub.s32 0, %v2733
    %v2735 = vrot.slane %v2730, %v2734
    %v2737 = vpack.i.b16 %v2689, %v2689
    %v2739 = vlaneseq
    %v2740 = vshrl.u32 %v2739, 7
    %v2741 = vsub.s32 0, %v2740
    %v2742 = vrot.slane %v2737, %v2741
    %v2744 = vpack.i.b16 %v2703, %v2703
    %v2746 = vlaneseq
    %v2747 = vshrl.u32 %v2746, 7
    %v2748 = vsub.s32 0, %v2747
    %v2749 = vrot.slane %v2744, %v2748
    %v2751 = vpack.i.b16 %v2705, %v2705
    %v2753 = vlaneseq
    %v2754 = vshrl.u32 %v2753, 7
    %v2755 = vsub.s32 0, %v2754
    %v2756 = vrot.slane %v2751, %v2755
    %v2758 = vpack.i.b16 %v2707, %v2707
    %v2760 = vlaneseq
    %v2761 = vshrl.u32 %v2760, 7
    %v2762 = vsub.s32 0, %v2761
    %v2763 = vrot.slane %v2758, %v2762
    %v2764 = vadd.bf16 %v2649, %v2714
    %v2765 = vadd.bf16 %v2650, %v2721
    %v2766 = vadd.bf16 %v2651, %v2728
    %v2767 = vadd.bf16 %v2652, %v2735
    %v2768 = vadd.bf16 %v2653, %v2742
    %v2769 = vadd.bf16 %v2654, %v2749
    %v2770 = vadd.bf16 %v2655, %v2756
    %v2771 = vadd.bf16 %v2656, %v2763
    %vm2772 = vcmp.gt.bf16.partialorder %v2764, 0
    %vm2773 = vcmp.gt.bf16.partialorder %v2765, 0
    %vm2774 = vcmp.gt.bf16.partialorder %v2766, 0
    %vm2775 = vcmp.gt.bf16.partialorder %v2767, 0
    %vm2776 = vcmp.gt.bf16.partialorder %v2768, 0
    %vm2777 = vcmp.gt.bf16.partialorder %v2769, 0
    %vm2778 = vcmp.gt.bf16.partialorder %v2770, 0
    %vm2779 = vcmp.gt.bf16.partialorder %v2771, 0
    %v2780 = vmul.bf16 %v2764, 1045249613
    %v2781 = vmul.bf16 %v2765, 1045249613
    %v2782 = vmul.bf16 %v2766, 1045249613
    %v2783 = vmul.bf16 %v2767, 1045249613
    %v2784 = vmul.bf16 %v2768, 1045249613
    %v2785 = vmul.bf16 %v2769, 1045249613
    %v2786 = vmul.bf16 %v2770, 1045249613
    %v2787 = vmul.bf16 %v2771, 1045249613
    %v2788 = vsel %vm2772, %v2764, %v2780
    %v2789 = vsel %vm2773, %v2765, %v2781
    %v2790 = vsel %vm2774, %v2766, %v2782
    %v2791 = vsel %vm2775, %v2767, %v2783
    %v2792 = vsel %vm2776, %v2768, %v2784
    %v2793 = vsel %vm2777, %v2769, %v2785
    %v2794 = vsel %vm2778, %v2770, %v2786
    %v2795 = vsel %vm2779, %v2771, %v2787
    %v2796 = vld [vmem:[%s7] sm:$0xf]
    %v2797 = vld [vmem:[%s7 + $0x4] sm:$0xf]
    %v2798 = vld [vmem:[%s7 + $0x8] sm:$0xf]
    %v2799 = vld [vmem:[%s7 + $0xc] sm:$0xf]
    %v2800 = vld [vmem:[%s7 + $0x10] sm:$0xf]
    %v2801 = vld [vmem:[%s7 + $0x14] sm:$0xf]
    %v2802 = vld [vmem:[%s7 + $0x18] sm:$0xf]
    %v2803 = vld [vmem:[%s7 + $0x1c] sm:$0xf]
    %v2804 = vld [vmem:[%s7 + $0x20] sm:$0xf]
    %v2805 = vld [vmem:[%s7 + $0x24] sm:$0xf]
    %v2806 = vld [vmem:[%s7 + $0x28] sm:$0xf]
    %v2807 = vld [vmem:[%s7 + $0x2c] sm:$0xf]
    %v2808 = vld [vmem:[%s7 + $0x30] sm:$0xf]
    %v2809 = vld [vmem:[%s7 + $0x34] sm:$0xf]
    %v2810 = vld [vmem:[%s7 + $0x38] sm:$0xf]
    %v2811 = vld [vmem:[%s7 + $0x3c] sm:$0xf]
    %v2812 = vld [vmem:[%s7 + $0x40] sm:$0xf]
    %v2813 = vld [vmem:[%s7 + $0x44] sm:$0xf]
    %v2814 = vld [vmem:[%s7 + $0x48] sm:$0xf]
    %v2815 = vld [vmem:[%s7 + $0x4c] sm:$0xf]
    %v2816 = vld [vmem:[%s7 + $0x50] sm:$0xf]
    %v2817 = vld [vmem:[%s7 + $0x54] sm:$0xf]
    %v2818 = vld [vmem:[%s7 + $0x58] sm:$0xf]
    %v2819 = vld [vmem:[%s7 + $0x5c] sm:$0xf]
    %v2820 = vld [vmem:[%s7 + $0x60] sm:$0xf]
    %v2821 = vld [vmem:[%s7 + $0x64] sm:$0xf]
    %v2822 = vld [vmem:[%s7 + $0x68] sm:$0xf]
    %v2823 = vld [vmem:[%s7 + $0x6c] sm:$0xf]
    %v2824 = vld [vmem:[%s7 + $0x70] sm:$0xf]
    %v2825 = vld [vmem:[%s7 + $0x74] sm:$0xf]
    %v2826 = vld [vmem:[%s7 + $0x78] sm:$0xf]
    %v2827 = vld [vmem:[%s7 + $0x7c] sm:$0xf]
    %v2828 = vld [vmem:[%s7 + $0x80] sm:$0xf]
    %v2829 = vld [vmem:[%s7 + $0x84] sm:$0xf]
    %v2830 = vld [vmem:[%s7 + $0x88] sm:$0xf]
    %v2831 = vld [vmem:[%s7 + $0x8c] sm:$0xf]
    %v2832 = vld [vmem:[%s7 + $0x90] sm:$0xf]
    %v2833 = vld [vmem:[%s7 + $0x94] sm:$0xf]
    %v2834 = vld [vmem:[%s7 + $0x98] sm:$0xf]
    %v2835 = vld [vmem:[%s7 + $0x9c] sm:$0xf]
    %v2836 = vld [vmem:[%s7 + $0xa0] sm:$0xf]
    %v2837 = vld [vmem:[%s7 + $0xa4] sm:$0xf]
    %v2838 = vld [vmem:[%s7 + $0xa8] sm:$0xf]
    %v2839 = vld [vmem:[%s7 + $0xac] sm:$0xf]
    %v2840 = vld [vmem:[%s7 + $0xb0] sm:$0xf]
    %v2841 = vld [vmem:[%s7 + $0xb4] sm:$0xf]
    %v2842 = vld [vmem:[%s7 + $0xb8] sm:$0xf]
    %v2843 = vld [vmem:[%s7 + $0xbc] sm:$0xf]
    %v2844 = vld [vmem:[%s7 + $0xc0] sm:$0xf]
    %v2845 = vld [vmem:[%s7 + $0xc4] sm:$0xf]
    %v2846 = vld [vmem:[%s7 + $0xc8] sm:$0xf]
    %v2847 = vld [vmem:[%s7 + $0xcc] sm:$0xf]
    %v2848 = vld [vmem:[%s7 + $0xd0] sm:$0xf]
    %v2849 = vld [vmem:[%s7 + $0xd4] sm:$0xf]
    %v2850 = vld [vmem:[%s7 + $0xd8] sm:$0xf]
    %v2851 = vld [vmem:[%s7 + $0xdc] sm:$0xf]
    %v2852 = vld [vmem:[%s7 + $0xe0] sm:$0xf]
    %v2853 = vld [vmem:[%s7 + $0xe4] sm:$0xf]
    %v2854 = vld [vmem:[%s7 + $0xe8] sm:$0xf]
    %v2855 = vld [vmem:[%s7 + $0xec] sm:$0xf]
    %v2856 = vld [vmem:[%s7 + $0xf0] sm:$0xf]
    %v2857 = vld [vmem:[%s7 + $0xf4] sm:$0xf]
    %v2858 = vld [vmem:[%s7 + $0xf8] sm:$0xf]
    %v2859 = vld [vmem:[%s7 + $0xfc] sm:$0xf]
    %v2860 = vld [vmem:[%s7 + $0x100] sm:$0xf]
    %v2861 = vld [vmem:[%s7 + $0x104] sm:$0xf]
    %v2862 = vld [vmem:[%s7 + $0x108] sm:$0xf]
    %v2863 = vld [vmem:[%s7 + $0x10c] sm:$0xf]
    %v2864 = vld [vmem:[%s7 + $0x110] sm:$0xf]
    %v2865 = vld [vmem:[%s7 + $0x114] sm:$0xf]
    %v2866 = vld [vmem:[%s7 + $0x118] sm:$0xf]
    %v2867 = vld [vmem:[%s7 + $0x11c] sm:$0xf]
    %v2868 = vld [vmem:[%s7 + $0x120] sm:$0xf]
    %v2869 = vld [vmem:[%s7 + $0x124] sm:$0xf]
    %v2870 = vld [vmem:[%s7 + $0x128] sm:$0xf]
    %v2871 = vld [vmem:[%s7 + $0x12c] sm:$0xf]
    %v2872 = vld [vmem:[%s7 + $0x130] sm:$0xf]
    %v2873 = vld [vmem:[%s7 + $0x134] sm:$0xf]
    %v2874 = vld [vmem:[%s7 + $0x138] sm:$0xf]
    %v2875 = vld [vmem:[%s7 + $0x13c] sm:$0xf]
    %v2876 = vld [vmem:[%s7 + $0x140] sm:$0xf]
    %v2877 = vld [vmem:[%s7 + $0x144] sm:$0xf]
    %v2878 = vld [vmem:[%s7 + $0x148] sm:$0xf]
    %v2879 = vld [vmem:[%s7 + $0x14c] sm:$0xf]
    %v2880 = vld [vmem:[%s7 + $0x150] sm:$0xf]
    %v2881 = vld [vmem:[%s7 + $0x154] sm:$0xf]
    %v2882 = vld [vmem:[%s7 + $0x158] sm:$0xf]
    %v2883 = vld [vmem:[%s7 + $0x15c] sm:$0xf]
    %v2884 = vld [vmem:[%s7 + $0x160] sm:$0xf]
    %v2885 = vld [vmem:[%s7 + $0x164] sm:$0xf]
    %v2886 = vld [vmem:[%s7 + $0x168] sm:$0xf]
    %v2887 = vld [vmem:[%s7 + $0x16c] sm:$0xf]
    %v2888 = vld [vmem:[%s7 + $0x170] sm:$0xf]
    %v2889 = vld [vmem:[%s7 + $0x174] sm:$0xf]
    %v2890 = vld [vmem:[%s7 + $0x178] sm:$0xf]
    %v2891 = vld [vmem:[%s7 + $0x17c] sm:$0xf]
    %v2892 = vld [vmem:[%s7 + $0x180] sm:$0xf]
    %v2893 = vld [vmem:[%s7 + $0x184] sm:$0xf]
    %v2894 = vld [vmem:[%s7 + $0x188] sm:$0xf]
    %v2895 = vld [vmem:[%s7 + $0x18c] sm:$0xf]
    %v2896 = vld [vmem:[%s7 + $0x190] sm:$0xf]
    %v2897 = vld [vmem:[%s7 + $0x194] sm:$0xf]
    %v2898 = vld [vmem:[%s7 + $0x198] sm:$0xf]
    %v2899 = vld [vmem:[%s7 + $0x19c] sm:$0xf]
    %v2900 = vld [vmem:[%s7 + $0x1a0] sm:$0xf]
    %v2901 = vld [vmem:[%s7 + $0x1a4] sm:$0xf]
    %v2902 = vld [vmem:[%s7 + $0x1a8] sm:$0xf]
    %v2903 = vld [vmem:[%s7 + $0x1ac] sm:$0xf]
    %v2904 = vld [vmem:[%s7 + $0x1b0] sm:$0xf]
    %v2905 = vld [vmem:[%s7 + $0x1b4] sm:$0xf]
    %v2906 = vld [vmem:[%s7 + $0x1b8] sm:$0xf]
    %v2907 = vld [vmem:[%s7 + $0x1bc] sm:$0xf]
    %v2908 = vld [vmem:[%s7 + $0x1c0] sm:$0xf]
    %v2909 = vld [vmem:[%s7 + $0x1c4] sm:$0xf]
    %v2910 = vld [vmem:[%s7 + $0x1c8] sm:$0xf]
    %v2911 = vld [vmem:[%s7 + $0x1cc] sm:$0xf]
    %v2912 = vld [vmem:[%s7 + $0x1d0] sm:$0xf]
    %v2913 = vld [vmem:[%s7 + $0x1d4] sm:$0xf]
    %v2914 = vld [vmem:[%s7 + $0x1d8] sm:$0xf]
    %v2915 = vld [vmem:[%s7 + $0x1dc] sm:$0xf]
    %v2916 = vld [vmem:[%s7 + $0x1e0] sm:$0xf]
    %v2917 = vld [vmem:[%s7 + $0x1e4] sm:$0xf]
    %v2918 = vld [vmem:[%s7 + $0x1e8] sm:$0xf]
    %v2919 = vld [vmem:[%s7 + $0x1ec] sm:$0xf]
    %v2920 = vld [vmem:[%s7 + $0x1f0] sm:$0xf]
    %v2921 = vld [vmem:[%s7 + $0x1f4] sm:$0xf]
    %v2922 = vld [vmem:[%s7 + $0x1f8] sm:$0xf]
    %v2923 = vld [vmem:[%s7 + $0x1fc] sm:$0xf]
    %v2924 = vld [vmem:[%s8] sm:$0x1]
    %v2926 = vlaneseq
    %v2927 = vshrl.u32 %v2926, 7
    %v2928 = vsub.s32 0, %v2927
    %v2929 = vrot.slane %v2924, %v2928
    %v3059 = vunpack.c.l.b16 %v2796
    %v3060 = vunpack.c.l.b16 %v2797
    %v3061 = vunpack.c.l.b16 %v2798
    %v3062 = vunpack.c.l.b16 %v2799
    %v3063 = vunpack.c.l.b16 %v2800
    %v3064 = vunpack.c.l.b16 %v2801
    %v3065 = vunpack.c.l.b16 %v2802
    %v3066 = vunpack.c.l.b16 %v2803
    %v3067 = vunpack.c.l.b16 %v2804
    %v3068 = vunpack.c.l.b16 %v2805
    %v3069 = vunpack.c.l.b16 %v2806
    %v3070 = vunpack.c.l.b16 %v2807
    %v3071 = vunpack.c.l.b16 %v2808
    %v3072 = vunpack.c.l.b16 %v2809
    %v3073 = vunpack.c.l.b16 %v2810
    %v3074 = vunpack.c.l.b16 %v2811
    %v3075 = vunpack.c.l.b16 %v2812
    %v3076 = vunpack.c.l.b16 %v2813
    %v3077 = vunpack.c.l.b16 %v2814
    %v3078 = vunpack.c.l.b16 %v2815
    %v3079 = vunpack.c.l.b16 %v2816
    %v3080 = vunpack.c.l.b16 %v2817
    %v3081 = vunpack.c.l.b16 %v2818
    %v3082 = vunpack.c.l.b16 %v2819
    %v3083 = vunpack.c.l.b16 %v2820
    %v3084 = vunpack.c.l.b16 %v2821
    %v3085 = vunpack.c.l.b16 %v2822
    %v3086 = vunpack.c.l.b16 %v2823
    %v3087 = vunpack.c.l.b16 %v2824
    %v3088 = vunpack.c.l.b16 %v2825
    %v3089 = vunpack.c.l.b16 %v2826
    %v3090 = vunpack.c.l.b16 %v2827
    %v3091 = vunpack.c.l.b16 %v2828
    %v3092 = vunpack.c.l.b16 %v2829
    %v3093 = vunpack.c.l.b16 %v2830
    %v3094 = vunpack.c.l.b16 %v2831
    %v3095 = vunpack.c.l.b16 %v2832
    %v3096 = vunpack.c.l.b16 %v2833
    %v3097 = vunpack.c.l.b16 %v2834
    %v3098 = vunpack.c.l.b16 %v2835
    %v3099 = vunpack.c.l.b16 %v2836
    %v3100 = vunpack.c.l.b16 %v2837
    %v3101 = vunpack.c.l.b16 %v2838
    %v3102 = vunpack.c.l.b16 %v2839
    %v3103 = vunpack.c.l.b16 %v2840
    %v3104 = vunpack.c.l.b16 %v2841
    %v3105 = vunpack.c.l.b16 %v2842
    %v3106 = vunpack.c.l.b16 %v2843
    %v3107 = vunpack.c.l.b16 %v2844
    %v3108 = vunpack.c.l.b16 %v2845
    %v3109 = vunpack.c.l.b16 %v2846
    %v3110 = vunpack.c.l.b16 %v2847
    %v3111 = vunpack.c.l.b16 %v2848
    %v3112 = vunpack.c.l.b16 %v2849
    %v3113 = vunpack.c.l.b16 %v2850
    %v3114 = vunpack.c.l.b16 %v2851
    %v3115 = vunpack.c.l.b16 %v2852
    %v3116 = vunpack.c.l.b16 %v2853
    %v3117 = vunpack.c.l.b16 %v2854
    %v3118 = vunpack.c.l.b16 %v2855
    %v3119 = vunpack.c.l.b16 %v2856
    %v3120 = vunpack.c.l.b16 %v2857
    %v3121 = vunpack.c.l.b16 %v2858
    %v3122 = vunpack.c.l.b16 %v2859
    %v3123 = vunpack.c.l.b16 %v2860
    %v3124 = vunpack.c.l.b16 %v2861
    %v3125 = vunpack.c.l.b16 %v2862
    %v3126 = vunpack.c.l.b16 %v2863
    %v3127 = vunpack.c.l.b16 %v2864
    %v3128 = vunpack.c.l.b16 %v2865
    %v3129 = vunpack.c.l.b16 %v2866
    %v3130 = vunpack.c.l.b16 %v2867
    %v3131 = vunpack.c.l.b16 %v2868
    %v3132 = vunpack.c.l.b16 %v2869
    %v3133 = vunpack.c.l.b16 %v2870
    %v3134 = vunpack.c.l.b16 %v2871
    %v3135 = vunpack.c.l.b16 %v2872
    %v3136 = vunpack.c.l.b16 %v2873
    %v3137 = vunpack.c.l.b16 %v2874
    %v3138 = vunpack.c.l.b16 %v2875
    %v3139 = vunpack.c.l.b16 %v2876
    %v3140 = vunpack.c.l.b16 %v2877
    %v3141 = vunpack.c.l.b16 %v2878
    %v3142 = vunpack.c.l.b16 %v2879
    %v3143 = vunpack.c.l.b16 %v2880
    %v3144 = vunpack.c.l.b16 %v2881
    %v3145 = vunpack.c.l.b16 %v2882
    %v3146 = vunpack.c.l.b16 %v2883
    %v3147 = vunpack.c.l.b16 %v2884
    %v3148 = vunpack.c.l.b16 %v2885
    %v3149 = vunpack.c.l.b16 %v2886
    %v3150 = vunpack.c.l.b16 %v2887
    %v3151 = vunpack.c.l.b16 %v2888
    %v3152 = vunpack.c.l.b16 %v2889
    %v3153 = vunpack.c.l.b16 %v2890
    %v3154 = vunpack.c.l.b16 %v2891
    %v3155 = vunpack.c.l.b16 %v2892
    %v3156 = vunpack.c.l.b16 %v2893
    %v3157 = vunpack.c.l.b16 %v2894
    %v3158 = vunpack.c.l.b16 %v2895
    %v3159 = vunpack.c.l.b16 %v2896
    %v3160 = vunpack.c.l.b16 %v2897
    %v3161 = vunpack.c.l.b16 %v2898
    %v3162 = vunpack.c.l.b16 %v2899
    %v3163 = vunpack.c.l.b16 %v2900
    %v3164 = vunpack.c.l.b16 %v2901
    %v3165 = vunpack.c.l.b16 %v2902
    %v3166 = vunpack.c.l.b16 %v2903
    %v3167 = vunpack.c.l.b16 %v2904
    %v3168 = vunpack.c.l.b16 %v2905
    %v3169 = vunpack.c.l.b16 %v2906
    %v3170 = vunpack.c.l.b16 %v2907
    %v3171 = vunpack.c.l.b16 %v2908
    %v3172 = vunpack.c.l.b16 %v2909
    %v3173 = vunpack.c.l.b16 %v2910
    %v3174 = vunpack.c.l.b16 %v2911
    %v3175 = vunpack.c.l.b16 %v2912
    %v3176 = vunpack.c.l.b16 %v2913
    %v3177 = vunpack.c.l.b16 %v2914
    %v3178 = vunpack.c.l.b16 %v2915
    %v3179 = vunpack.c.l.b16 %v2916
    %v3180 = vunpack.c.l.b16 %v2917
    %v3181 = vunpack.c.l.b16 %v2918
    %v3182 = vunpack.c.l.b16 %v2919
    %v3183 = vunpack.c.l.b16 %v2920
    %v3184 = vunpack.c.l.b16 %v2921
    %v3185 = vunpack.c.l.b16 %v2922
    %v3186 = vunpack.c.l.b16 %v2923
    %v3187 = vpack.c.b16 %v3060, %v3059
    %v3188 = vpack.c.b16 %v3062, %v3061
    %v3189 = vpack.c.b16 %v3064, %v3063
    %v3190 = vpack.c.b16 %v3066, %v3065
    %v3191 = vpack.c.b16 %v3068, %v3067
    %v3192 = vpack.c.b16 %v3070, %v3069
    %v3193 = vpack.c.b16 %v3072, %v3071
    %v3194 = vpack.c.b16 %v3074, %v3073
    %v3195 = vpack.c.b16 %v3076, %v3075
    %v3196 = vpack.c.b16 %v3078, %v3077
    %v3197 = vpack.c.b16 %v3080, %v3079
    %v3198 = vpack.c.b16 %v3082, %v3081
    %v3199 = vpack.c.b16 %v3084, %v3083
    %v3200 = vpack.c.b16 %v3086, %v3085
    %v3201 = vpack.c.b16 %v3088, %v3087
    %v3202 = vpack.c.b16 %v3090, %v3089
    %v3203 = vpack.c.b16 %v3092, %v3091
    %v3204 = vpack.c.b16 %v3094, %v3093
    %v3205 = vpack.c.b16 %v3096, %v3095
    %v3206 = vpack.c.b16 %v3098, %v3097
    %v3207 = vpack.c.b16 %v3100, %v3099
    %v3208 = vpack.c.b16 %v3102, %v3101
    %v3209 = vpack.c.b16 %v3104, %v3103
    %v3210 = vpack.c.b16 %v3106, %v3105
    %v3211 = vpack.c.b16 %v3108, %v3107
    %v3212 = vpack.c.b16 %v3110, %v3109
    %v3213 = vpack.c.b16 %v3112, %v3111
    %v3214 = vpack.c.b16 %v3114, %v3113
    %v3215 = vpack.c.b16 %v3116, %v3115
    %v3216 = vpack.c.b16 %v3118, %v3117
    %v3217 = vpack.c.b16 %v3120, %v3119
    %v3218 = vpack.c.b16 %v3122, %v3121
    %v3219 = vpack.c.b16 %v3124, %v3123
    %v3220 = vpack.c.b16 %v3126, %v3125
    %v3221 = vpack.c.b16 %v3128, %v3127
    %v3222 = vpack.c.b16 %v3130, %v3129
    %v3223 = vpack.c.b16 %v3132, %v3131
    %v3224 = vpack.c.b16 %v3134, %v3133
    %v3225 = vpack.c.b16 %v3136, %v3135
    %v3226 = vpack.c.b16 %v3138, %v3137
    %v3227 = vpack.c.b16 %v3140, %v3139
    %v3228 = vpack.c.b16 %v3142, %v3141
    %v3229 = vpack.c.b16 %v3144, %v3143
    %v3230 = vpack.c.b16 %v3146, %v3145
    %v3231 = vpack.c.b16 %v3148, %v3147
    %v3232 = vpack.c.b16 %v3150, %v3149
    %v3233 = vpack.c.b16 %v3152, %v3151
    %v3234 = vpack.c.b16 %v3154, %v3153
    %v3235 = vpack.c.b16 %v3156, %v3155
    %v3236 = vpack.c.b16 %v3158, %v3157
    %v3237 = vpack.c.b16 %v3160, %v3159
    %v3238 = vpack.c.b16 %v3162, %v3161
    %v3239 = vpack.c.b16 %v3164, %v3163
    %v3240 = vpack.c.b16 %v3166, %v3165
    %v3241 = vpack.c.b16 %v3168, %v3167
    %v3242 = vpack.c.b16 %v3170, %v3169
    %v3243 = vpack.c.b16 %v3172, %v3171
    %v3244 = vpack.c.b16 %v3174, %v3173
    %v3245 = vpack.c.b16 %v3176, %v3175
    %v3246 = vpack.c.b16 %v3178, %v3177
    %v3247 = vpack.c.b16 %v3180, %v3179
    %v3248 = vpack.c.b16 %v3182, %v3181
    %v3249 = vpack.c.b16 %v3184, %v3183
    %v3250 = vpack.c.b16 %v3186, %v3185
    %3315 = vmatprep.subr.bf16.mxu0 0
    %3316 = vmatpush1.bf16.msra.mxu0 %v3187
    %3317 = vmatprep.subr.bf16.mxu0 0
    %3318 = vmatpush1.bf16.msra.mxu0 %v3188
    %3319 = vmatprep.subr.bf16.mxu0 0
    %3320 = vmatpush1.bf16.msra.mxu0 %v3189
    %3321 = vmatprep.subr.bf16.mxu0 0
    %3322 = vmatpush1.bf16.msra.mxu0 %v3190
    %3323 = vmatprep.subr.bf16.mxu0 0
    %3324 = vmatpush1.bf16.msra.mxu0 %v3191
    %3325 = vmatprep.subr.bf16.mxu0 0
    %3326 = vmatpush1.bf16.msra.mxu0 %v3192
    %3327 = vmatprep.subr.bf16.mxu0 0
    %3328 = vmatpush1.bf16.msra.mxu0 %v3193
    %3329 = vmatprep.subr.bf16.mxu0 0
    %3330 = vmatpush1.bf16.msra.mxu0 %v3194
    %3331 = vmatprep.subr.bf16.mxu0 0
    %3332 = vmatpush1.bf16.msra.mxu0 %v3195
    %3333 = vmatprep.subr.bf16.mxu0 0
    %3334 = vmatpush1.bf16.msra.mxu0 %v3196
    %3335 = vmatprep.subr.bf16.mxu0 0
    %3336 = vmatpush1.bf16.msra.mxu0 %v3197
    %3337 = vmatprep.subr.bf16.mxu0 0
    %3338 = vmatpush1.bf16.msra.mxu0 %v3198
    %3339 = vmatprep.subr.bf16.mxu0 0
    %3340 = vmatpush1.bf16.msra.mxu0 %v3199
    %3341 = vmatprep.subr.bf16.mxu0 0
    %3342 = vmatpush1.bf16.msra.mxu0 %v3200
    %3343 = vmatprep.subr.bf16.mxu0 0
    %3344 = vmatpush1.bf16.msra.mxu0 %v3201
    %3345 = vmatprep.subr.bf16.mxu0 0
    %3346 = vmatpush1.bf16.msra.mxu0 %v3202
    %3347 = vmatprep.mubr.bf16.mxu0 %v2789
    %3348 = vmatmul.mubr.bf16.gmra.mrb[0].mxu0 %v2788
    %v3349 = vpop.f32.mrb[0].mxu0
    %v3350 = vadd.f32 %v2929, %v3349
    %v3351 = vpop.f32.mrb[0].mxu0
    %v3352 = vpop.f32.mrb[0].mxu0
    %v3353 = vadd.f32 %v2929, %v3352
    %v3354 = vpop.f32.mrb[0].mxu0
    %3355 = vdwg.mxu0
    %3356 = vmatprep.subr.bf16.mxu0 0
    %3357 = vmatpush1.bf16.msra.mxu0 %v3203
    %3358 = vmatprep.subr.bf16.mxu0 0
    %3359 = vmatpush1.bf16.msra.mxu0 %v3204
    %3360 = vmatprep.subr.bf16.mxu0 0
    %3361 = vmatpush1.bf16.msra.mxu0 %v3205
    %3362 = vmatprep.subr.bf16.mxu0 0
    %3363 = vmatpush1.bf16.msra.mxu0 %v3206
    %3364 = vmatprep.subr.bf16.mxu0 0
    %3365 = vmatpush1.bf16.msra.mxu0 %v3207
    %3366 = vmatprep.subr.bf16.mxu0 0
    %3367 = vmatpush1.bf16.msra.mxu0 %v3208
    %3368 = vmatprep.subr.bf16.mxu0 0
    %3369 = vmatpush1.bf16.msra.mxu0 %v3209
    %3370 = vmatprep.subr.bf16.mxu0 0
    %3371 = vmatpush1.bf16.msra.mxu0 %v3210
    %3372 = vmatprep.subr.bf16.mxu0 0
    %3373 = vmatpush1.bf16.msra.mxu0 %v3211
    %3374 = vmatprep.subr.bf16.mxu0 0
    %3375 = vmatpush1.bf16.msra.mxu0 %v3212
    %3376 = vmatprep.subr.bf16.mxu0 0
    %3377 = vmatpush1.bf16.msra.mxu0 %v3213
    %3378 = vmatprep.subr.bf16.mxu0 0
    %3379 = vmatpush1.bf16.msra.mxu0 %v3214
    %3380 = vmatprep.subr.bf16.mxu0 0
    %3381 = vmatpush1.bf16.msra.mxu0 %v3215
    %3382 = vmatprep.subr.bf16.mxu0 0
    %3383 = vmatpush1.bf16.msra.mxu0 %v3216
    %3384 = vmatprep.subr.bf16.mxu0 0
    %3385 = vmatpush1.bf16.msra.mxu0 %v3217
    %3386 = vmatprep.subr.bf16.mxu0 0
    %3387 = vmatpush1.bf16.msra.mxu0 %v3218
    %3388 = vmatprep.mubr.bf16.mxu0 %v2791
    %3389 = vmatmul.mubr.bf16.gmra.mrb[0].mxu0 %v2790
    %v3390 = vpop.f32.mrb[0].mxu0
    %v3391 = vadd.f32 %v3350, %v3390
    %v3392 = vpop.f32.mrb[0].mxu0
    %v3393 = vpop.f32.mrb[0].mxu0
    %v3394 = vadd.f32 %v3353, %v3393
    %v3395 = vpop.f32.mrb[0].mxu0
    %3396 = vdwg.mxu0
    %3397 = vmatprep.subr.bf16.mxu0 0
    %3398 = vmatpush1.bf16.msra.mxu0 %v3219
    %3399 = vmatprep.subr.bf16.mxu0 0
    %3400 = vmatpush1.bf16.msra.mxu0 %v3220
    %3401 = vmatprep.subr.bf16.mxu0 0
    %3402 = vmatpush1.bf16.msra.mxu0 %v3221
    %3403 = vmatprep.subr.bf16.mxu0 0
    %3404 = vmatpush1.bf16.msra.mxu0 %v3222
    %3405 = vmatprep.subr.bf16.mxu0 0
    %3406 = vmatpush1.bf16.msra.mxu0 %v3223
    %3407 = vmatprep.subr.bf16.mxu0 0
    %3408 = vmatpush1.bf16.msra.mxu0 %v3224
    %3409 = vmatprep.subr.bf16.mxu0 0
    %3410 = vmatpush1.bf16.msra.mxu0 %v3225
    %3411 = vmatprep.subr.bf16.mxu0 0
    %3412 = vmatpush1.bf16.msra.mxu0 %v3226
    %3413 = vmatprep.subr.bf16.mxu0 0
    %3414 = vmatpush1.bf16.msra.mxu0 %v3227
    %3415 = vmatprep.subr.bf16.mxu0 0
    %3416 = vmatpush1.bf16.msra.mxu0 %v3228
    %3417 = vmatprep.subr.bf16.mxu0 0
    %3418 = vmatpush1.bf16.msra.mxu0 %v3229
    %3419 = vmatprep.subr.bf16.mxu0 0
    %3420 = vmatpush1.bf16.msra.mxu0 %v3230
    %3421 = vmatprep.subr.bf16.mxu0 0
    %3422 = vmatpush1.bf16.msra.mxu0 %v3231
    %3423 = vmatprep.subr.bf16.mxu0 0
    %3424 = vmatpush1.bf16.msra.mxu0 %v3232
    %3425 = vmatprep.subr.bf16.mxu0 0
    %3426 = vmatpush1.bf16.msra.mxu0 %v3233
    %3427 = vmatprep.subr.bf16.mxu0 0
    %3428 = vmatpush1.bf16.msra.mxu0 %v3234
    %3429 = vmatprep.mubr.bf16.mxu0 %v2793
    %3430 = vmatmul.mubr.bf16.gmra.mrb[0].mxu0 %v2792
    %v3431 = vpop.f32.mrb[0].mxu0
    %v3432 = vadd.f32 %v3391, %v3431
    %v3433 = vpop.f32.mrb[0].mxu0
    %v3434 = vpop.f32.mrb[0].mxu0
    %v3435 = vadd.f32 %v3394, %v3434
    %v3436 = vpop.f32.mrb[0].mxu0
    %3437 = vdwg.mxu0
    %3438 = vmatprep.subr.bf16.mxu0 0
    %3439 = vmatpush1.bf16.msra.mxu0 %v3235
    %3440 = vmatprep.subr.bf16.mxu0 0
    %3441 = vmatpush1.bf16.msra.mxu0 %v3236
    %3442 = vmatprep.subr.bf16.mxu0 0
    %3443 = vmatpush1.bf16.msra.mxu0 %v3237
    %3444 = vmatprep.subr.bf16.mxu0 0
    %3445 = vmatpush1.bf16.msra.mxu0 %v3238
    %3446 = vmatprep.subr.bf16.mxu0 0
    %3447 = vmatpush1.bf16.msra.mxu0 %v3239
    %3448 = vmatprep.subr.bf16.mxu0 0
    %3449 = vmatpush1.bf16.msra.mxu0 %v3240
    %3450 = vmatprep.subr.bf16.mxu0 0
    %3451 = vmatpush1.bf16.msra.mxu0 %v3241
    %3452 = vmatprep.subr.bf16.mxu0 0
    %3453 = vmatpush1.bf16.msra.mxu0 %v3242
    %3454 = vmatprep.subr.bf16.mxu0 0
    %3455 = vmatpush1.bf16.msra.mxu0 %v3243
    %3456 = vmatprep.subr.bf16.mxu0 0
    %3457 = vmatpush1.bf16.msra.mxu0 %v3244
    %3458 = vmatprep.subr.bf16.mxu0 0
    %3459 = vmatpush1.bf16.msra.mxu0 %v3245
    %3460 = vmatprep.subr.bf16.mxu0 0
    %3461 = vmatpush1.bf16.msra.mxu0 %v3246
    %3462 = vmatprep.subr.bf16.mxu0 0
    %3463 = vmatpush1.bf16.msra.mxu0 %v3247
    %3464 = vmatprep.subr.bf16.mxu0 0
    %3465 = vmatpush1.bf16.msra.mxu0 %v3248
    %3466 = vmatprep.subr.bf16.mxu0 0
    %3467 = vmatpush1.bf16.msra.mxu0 %v3249
    %3468 = vmatprep.subr.bf16.mxu0 0
    %3469 = vmatpush1.bf16.msra.mxu0 %v3250
    %3470 = vmatprep.mubr.bf16.mxu0 %v2795
    %3471 = vmatmul.mubr.bf16.gmra.mrb[0].mxu0 %v2794
    %v3472 = vpop.f32.mrb[0].mxu0
    %v3473 = vadd.f32 %v3432, %v3472
    %v3474 = vpop.f32.mrb[0].mxu0
    %v3475 = vpop.f32.mrb[0].mxu0
    %v3476 = vadd.f32 %v3435, %v3475
    %v3477 = vpop.f32.mrb[0].mxu0
    %3478 = vdwg.mxu0
    %v3479 = vtanh.pop %v3473
    %v3480 = vtanh.pop %v3476
    %3481 = vst [vmem:[#allocation2] sm:$0xff] %v3479
    %3482 = vst [vmem:[#allocation2 + $0x8] sm:$0xff] %v3480
    // Predicated region
    $region38: #{_generator_forward_impl.1} parent=1 // pred_check
      _
    $region39: #{_generator_forward_impl.1} parent=1 // pred_check_branch
      %3484 = sbr.rel (0) target = $region41
    $region40: #{_generator_forward_impl.1} parent=1 // pred_region
      %s3486 = ssub.s32 256, 256
      %3487 = vsyncadd [#allocation3], %s3486
      %s3488 = sshll.u32 [#allocation2], 4
      %s3489 = int_to_ptr.vmem [resolvable:$true] %s3488
      %3494 = dma.vmem_to_hbm [thread:$0]  %s3489, 256, %s9, [#allocation3], 128, 128, 8
    $region41: #{_generator_forward_impl.1} parent=1 // pred_fallthru
      _
    // Predicated region
    $region42: #{_generator_forward_impl.1} parent=1 // pred_check
      _
    $region43: #{_generator_forward_impl.1} parent=1 // pred_check_branch
      %3496 = sbr.rel (0) target = $region45
    $region44: #{_generator_forward_impl.1} parent=1 // pred_region
      %3497 = dma.done [#allocation3], 256
    $region45: #{_generator_forward_impl.1} parent=1 // pred_fallthru
      _
    %3498 = vsyncpa [#allocation3], 1

</llo_original>
